<compile_context>
chip_gen: v7x
topology: tpu7x:2x2x1
jax: 0.10.0
libtpu: 0.0.40
codegen_flags: <defaults>
</compile_context>

<pallas_src>
import jax
import jax.numpy as jnp
from jax.experimental import pallas as pl
from jax.experimental.pallas import tpu as pltpu  # noqa: F401  (kept for easy scratch/DMA additions)

# ---------------------------------------------------------------------------
# Config (stands in for the configparser values in the original script)
# ---------------------------------------------------------------------------
INPUT_SIZE = 8          # config 'input_size'
HIDDEN_SIZE = 32        # config 'hidden_size'
LSTM_LAYERS = 2         # config 'lstm_layers'
OUTPUT_SIZE = 4         # config 'output_size'

BATCH = 2
SEQ = 8

SUBLANE = 8             # f32 sublane count
LANES = 128             # lane width


# ---------------------------------------------------------------------------
# Fused kernel: all LSTM layers + final Linear, full sequence, one invocation.
# Gate order follows PyTorch: [i, f, g, o] along the 4H (lane) axis.
# The g-gate pre-activation arrives pre-scaled by 2 (folded into the weights
# in the wrapper), so tanh(z) == 2*sigmoid(2z) - 1 needs only a VALU fixup.
# ---------------------------------------------------------------------------
def _make_fused_kernel(num_layers, T, B, H):
    def lstm_cell(gates, c):
        # Single EUP pass over the whole (B, 4H) vreg.
        act = jax.nn.sigmoid(gates)
        i_g = act[:, 0 * H:1 * H]
        f_g = act[:, 1 * H:2 * H]
        g_g = 2.0 * act[:, 2 * H:3 * H] - 1.0       # tanh via folded 2x scale
        o_g = act[:, 3 * H:4 * H]
        c_new = f_g * c + i_g * g_g
        h_new = o_g * jnp.tanh(c_new)
        return h_new, c_new

    def kernel(*refs):
        # refs = (x2d, w_ih0_t, w_hh0_t, b0,
        #         [w_stacked_l, b_l] for l in 1..L-1,
        #         w_lin_pad, b_lin_pad, out)
        x_ref, wih0_ref, whh0_ref, b0_ref = refs[0], refs[1], refs[2], refs[3]
        deep = [(refs[4 + 2 * i], refs[5 + 2 * i]) for i in range(num_layers - 1)]
        base = 4 + 2 * (num_layers - 1)
        wlin_ref, blin_ref, out_ref = refs[base], refs[base + 1], refs[base + 2]

        # Layer-0 input projection for ALL timesteps: one batched MXU matmul,
        # bias broadcast hoisted off the recurrent critical chain.
        proj0 = (jnp.dot(x_ref[...], wih0_ref[...],
                         preferred_element_type=jnp.float32) + b0_ref[...])
        whh0 = whh0_ref[...]                              # (H, 4H)
        w_deep = [w[...] for w, _ in deep]                # (2H, 4H) each
        b_deep = [b[...] for _, b in deep]                # (1, 4H) each

        h = [jnp.zeros((B, H), jnp.float32) for _ in range(num_layers)]
        c = [jnp.zeros((B, H), jnp.float32) for _ in range(num_layers)]

        # Wavefront schedule: outer step s runs layer l's timestep s-l.
        # Within an outer step the per-layer updates are mutually independent
        # (each consumes only the previous outer step's snapshot), so the LLO
        # scheduler can overlap their MXU / EUP latency.
        for s in range(T + num_layers - 1):
            h_prev = list(h)                              # snapshot
            if s < T:
                gates0 = proj0[s * B:(s + 1) * B, :] + jnp.dot(
                    h_prev[0], whh0, preferred_element_type=jnp.float32)
                h[0], c[0] = lstm_cell(gates0, c[0])
            for l in range(1, num_layers):
                t_l = s - l
                if 0 <= t_l < T:
                    # Fused recurrent + input projection: single K=2H matmul.
                    inp = jnp.concatenate([h_prev[l], h_prev[l - 1]], axis=1)
                    gates = jnp.dot(inp, w_deep[l - 1],
                                    preferred_element_type=jnp.float32) + b_deep[l - 1]
                    h[l], c[l] = lstm_cell(gates, c[l])

        # Final Linear on the last timestep of the last layer.  Output is
        # lane-dense (N padded to 128) so the single HBM write is a full vst.
        out_ref[...] = (jnp.dot(h[num_layers - 1], wlin_ref[...],
                                preferred_element_type=jnp.float32)
                        + blin_ref[...]).astype(out_ref.dtype)

    return kernel


# ---------------------------------------------------------------------------
# Parameters (PyTorch LSTM/Linear shapes, pre-transposed / bias pre-summed)
# ---------------------------------------------------------------------------
def init_params(key, input_size, hidden_size, num_layers, output_size):
    """PyTorch stores weight_ih_l{k}: (4H, D_in_k), weight_hh_l{k}: (4H, H),
    biases b_ih/b_hh: (4H,). We keep W^T and (b_ih + b_hh)."""
    params = {"lstm": []}
    k = 1.0 / jnp.sqrt(hidden_size)
    for layer in range(num_layers):
        d_in = input_size if layer == 0 else hidden_size
        key, k1, k2, k3, k4 = jax.random.split(key, 5)
        w_ih = jax.random.uniform(k1, (4 * hidden_size, d_in), jnp.float32, -k, k)
        w_hh = jax.random.uniform(k2, (4 * hidden_size, hidden_size), jnp.float32, -k, k)
        b_ih = jax.random.uniform(k3, (4 * hidden_size,), jnp.float32, -k, k)
        b_hh = jax.random.uniform(k4, (4 * hidden_size,), jnp.float32, -k, k)
        params["lstm"].append(
            dict(
                w_ih_t=w_ih.T,                                # (D_in, 4H)
                w_hh_t=w_hh.T,                                # (H, 4H)
                b=(b_ih + b_hh).reshape(1, 4 * hidden_size),  # (1, 4H)
            )
        )
    key, k5, k6 = jax.random.split(key, 3)
    kl = 1.0 / jnp.sqrt(hidden_size)
    w_lin = jax.random.uniform(k5, (output_size, hidden_size), jnp.float32, -kl, kl)
    b_lin = jax.random.uniform(k6, (output_size,), jnp.float32, -kl, kl)
    params["linear"] = dict(w_t=w_lin.T, b=b_lin.reshape(1, output_size))
    return params


# ---------------------------------------------------------------------------
# VanillaLSTM forward
# ---------------------------------------------------------------------------
@jax.jit
def vanilla_lstm_forward(params, x):
    """x: (B, T, input_size) batch_first, like the PyTorch module.
    Returns (B, output_size)."""
    B0, T, D_in = x.shape
    H = params["lstm"][0]["w_hh_t"].shape[0]
    O = params["linear"]["w_t"].shape[1]
    num_layers = len(params["lstm"])

    # Pad batch to a sublane multiple so every (B, ...) tile fills its sublanes.
    B = max(SUBLANE, ((B0 + SUBLANE - 1) // SUBLANE) * SUBLANE)
    xf = x.astype(jnp.float32)
    if B != B0:
        xf = jnp.pad(xf, ((0, B - B0), (0, 0), (0, 0)))

    # Layout once in the wrapper: time-major, flattened to 2-D so every matmul
    # inside the kernel is rank-2 and each timestep is a contiguous row block.
    x2d = jnp.transpose(xf, (1, 0, 2)).reshape(T * B, D_in)

    # Fold a 2x scale into the g-gate (tanh) columns so the kernel needs only
    # one full-width sigmoid per step: tanh(z) = 2*sigmoid(2z) - 1.
    g_scale = jnp.concatenate(
        [jnp.ones((1, 2 * H), jnp.float32),
         jnp.full((1, H), 2.0, jnp.float32),
         jnp.ones((1, H), jnp.float32)], axis=1)              # (1, 4H)

    lp0 = params["lstm"][0]
    w_ih0 = lp0["w_ih_t"] * g_scale
    w_hh0 = lp0["w_hh_t"] * g_scale
    b0 = lp0["b"] * g_scale

    inputs = [x2d, w_ih0, w_hh0, b0]
    in_specs = [
        pl.BlockSpec((T * B, D_in), lambda: (0, 0)),
        pl.BlockSpec((D_in, 4 * H), lambda: (0, 0)),
        pl.BlockSpec((H, 4 * H), lambda: (0, 0)),
        pl.BlockSpec((1, 4 * H), lambda: (0, 0)),
    ]
    for lp in params["lstm"][1:]:
        w_ih_s = lp["w_ih_t"] * g_scale                       # (H, 4H)
        w_hh_s = lp["w_hh_t"] * g_scale                       # (H, 4H)
        b_s = lp["b"] * g_scale                               # (1, 4H)
        # Fused recurrent + input projection: [h_l | h_{l-1}] @ [W_hh; W_ih].
        w_stacked = jnp.concatenate([w_hh_s, w_ih_s], axis=0)  # (2H, 4H)
        inputs += [w_stacked, b_s]
        in_specs += [
            pl.BlockSpec((2 * H, 4 * H), lambda: (0, 0)),
            pl.BlockSpec((1, 4 * H), lambda: (0, 0)),
        ]

    # Lane-dense final Linear: pad N from O up to 128; slice back outside.
    O_pad = LANES
    w_lin_pad = jnp.zeros((H, O_pad), jnp.float32).at[:, :O].set(params["linear"]["w_t"])
    b_lin_pad = jnp.zeros((1, O_pad), jnp.float32).at[:, :O].set(params["linear"]["b"])
    inputs += [w_lin_pad, b_lin_pad]
    in_specs += [
        pl.BlockSpec((H, O_pad), lambda: (0, 0)),
        pl.BlockSpec((1, O_pad), lambda: (0, 0)),
    ]

    out = pl.pallas_call(
        _make_fused_kernel(num_layers, T, B, H),
        out_shape=jax.ShapeDtypeStruct((B, O_pad), jnp.float32),
        in_specs=in_specs,
        out_specs=pl.BlockSpec((B, O_pad), lambda: (0, 0)),
    )(*inputs)
    return out[:B0, :O]


# ---------------------------------------------------------------------------
# Pure-JAX reference (for a sanity check) — uses the original, unscaled params
# ---------------------------------------------------------------------------
def reference_forward(params, x):
    h_seq = jnp.transpose(x, (1, 0, 2)).astype(jnp.float32)
    H = params["lstm"][0]["w_hh_t"].shape[0]
    for layer_p in params["lstm"]:
        T, B, _ = h_seq.shape
        h = jnp.zeros((B, H), jnp.float32)
        c = jnp.zeros((B, H), jnp.float32)
        outs = []
        for t in range(T):
            gates = h_seq[t] @ layer_p["w_ih_t"] + h @ layer_p["w_hh_t"] + layer_p["b"]
            i = jax.nn.sigmoid(gates[:, 0 * H:1 * H])
            f = jax.nn.sigmoid(gates[:, 1 * H:2 * H])
            g = jnp.tanh(gates[:, 2 * H:3 * H])
            o = jax.nn.sigmoid(gates[:, 3 * H:4 * H])
            c = f * c + i * g
            h = o * jnp.tanh(c)
            outs.append(h)
        h_seq = jnp.stack(outs, axis=0)
    return h_seq[-1] @ params["linear"]["w_t"] + params["linear"]["b"]


if __name__ == "__main__":
    key = jax.random.PRNGKey(0)
    key, pkey, xkey = jax.random.split(key, 3)

    params = init_params(pkey, INPUT_SIZE, HIDDEN_SIZE, LSTM_LAYERS, OUTPUT_SIZE)
    x = jax.random.normal(xkey, (BATCH, SEQ, INPUT_SIZE), jnp.float32)

    out = vanilla_lstm_forward(params, x)
    out = jax.block_until_ready(out)

    ref = reference_forward(params, x)
    assert out.shape == (BATCH, OUTPUT_SIZE), out.shape
    assert jnp.allclose(out, ref, atol=5e-5, rtol=5e-5), (out, ref)

    print("KERNEL_OK")
</pallas_src>

<mosaic_0001>
module attributes {stable_mosaic.version = 11 : i64} {
  func.func @kernel(%arg0: memref<64x8xf32, #tpu.memory_space<vmem>>, %arg1: memref<8x128xf32, #tpu.memory_space<vmem>>, %arg2: memref<32x128xf32, #tpu.memory_space<vmem>>, %arg3: memref<1x128xf32, #tpu.memory_space<vmem>>, %arg4: memref<64x128xf32, #tpu.memory_space<vmem>>, %arg5: memref<1x128xf32, #tpu.memory_space<vmem>>, %arg6: memref<32x128xf32, #tpu.memory_space<vmem>>, %arg7: memref<1x128xf32, #tpu.memory_space<vmem>>, %arg8: memref<8x128xf32, #tpu.memory_space<vmem>>) attributes {dimension_semantics = [], scalar_prefetch = 0 : i64, scratch_operands = 0 : i64, tpu.core_type = #tpu.core_type<tc>} {
    %c0 = arith.constant 0 : index
    %c0_0 = arith.constant 0 : index
    %0 = vector.load %arg0[%c0, %c0_0] : memref<64x8xf32, #tpu.memory_space<vmem>>, vector<64x8xf32>
    %c0_1 = arith.constant 0 : index
    %c0_2 = arith.constant 0 : index
    %1 = vector.load %arg1[%c0_1, %c0_2] : memref<8x128xf32, #tpu.memory_space<vmem>>, vector<8x128xf32>
    %cst = arith.constant dense<0.000000e+00> : vector<64x128xf32>
    %2 = tpu.matmul %0, %1, %cst {dimension_numbers = #tpu.dot_dimension_numbers<[1], [0], [0], [1], [0, 0, 1, 1], [], []>} : vector<64x8xf32>, vector<8x128xf32>, vector<64x128xf32> -> vector<64x128xf32>
    %c0_3 = arith.constant 0 : index
    %c0_4 = arith.constant 0 : index
    %3 = vector.load %arg3[%c0_3, %c0_4] : memref<1x128xf32, #tpu.memory_space<vmem>>, vector<1x128xf32>
    %4 = vector.broadcast %3 : vector<1x128xf32> to vector<64x128xf32>
    %5 = arith.addf %2, %4 : vector<64x128xf32>
    %c0_5 = arith.constant 0 : index
    %c0_6 = arith.constant 0 : index
    %6 = vector.load %arg2[%c0_5, %c0_6] : memref<32x128xf32, #tpu.memory_space<vmem>>, vector<32x128xf32>
    %c0_7 = arith.constant 0 : index
    %c0_8 = arith.constant 0 : index
    %7 = vector.load %arg4[%c0_7, %c0_8] : memref<64x128xf32, #tpu.memory_space<vmem>>, vector<64x128xf32>
    %c0_9 = arith.constant 0 : index
    %c0_10 = arith.constant 0 : index
    %8 = vector.load %arg5[%c0_9, %c0_10] : memref<1x128xf32, #tpu.memory_space<vmem>>, vector<1x128xf32>
    %cst_11 = arith.constant 0.000000e+00 : f32
    %9 = vector.broadcast %cst_11 : f32 to vector<8x32xf32>
    %cst_12 = arith.constant 0.000000e+00 : f32
    %10 = vector.broadcast %cst_12 : f32 to vector<8x32xf32>
    %cst_13 = arith.constant 0.000000e+00 : f32
    %11 = vector.broadcast %cst_13 : f32 to vector<8x32xf32>
    %cst_14 = arith.constant 0.000000e+00 : f32
    %12 = vector.broadcast %cst_14 : f32 to vector<8x32xf32>
    %13 = vector.extract_strided_slice %5 {offsets = [0, 0], sizes = [8, 128], strides = [1, 1]} : vector<64x128xf32> to vector<8x128xf32>
    %cst_15 = arith.constant dense<0.000000e+00> : vector<8x128xf32>
    %14 = tpu.matmul %9, %6, %cst_15 {dimension_numbers = #tpu.dot_dimension_numbers<[1], [0], [0], [1], [0, 0, 1, 1], [], []>} : vector<8x32xf32>, vector<32x128xf32>, vector<8x128xf32> -> vector<8x128xf32>
    %15 = arith.addf %13, %14 : vector<8x128xf32>
    %16 = arith.negf %15 : vector<8x128xf32>
    %17 = math.exp %16 : vector<8x128xf32>
    %cst_16 = arith.constant 1.000000e+00 : f32
    %18 = vector.broadcast %cst_16 : f32 to vector<8x128xf32>
    %19 = arith.addf %18, %17 : vector<8x128xf32>
    %20 = arith.divf %18, %19 : vector<8x128xf32>
    %21 = vector.extract_strided_slice %20 {offsets = [0, 0], sizes = [8, 32], strides = [1, 1]} : vector<8x128xf32> to vector<8x32xf32>
    %22 = vector.extract_strided_slice %20 {offsets = [0, 32], sizes = [8, 32], strides = [1, 1]} : vector<8x128xf32> to vector<8x32xf32>
    %23 = vector.extract_strided_slice %20 {offsets = [0, 64], sizes = [8, 32], strides = [1, 1]} : vector<8x128xf32> to vector<8x32xf32>
    %cst_17 = arith.constant 2.000000e+00 : f32
    %24 = vector.broadcast %cst_17 : f32 to vector<8x32xf32>
    %25 = arith.mulf %24, %23 : vector<8x32xf32>
    %cst_18 = arith.constant 1.000000e+00 : f32
    %26 = vector.broadcast %cst_18 : f32 to vector<8x32xf32>
    %27 = arith.subf %25, %26 : vector<8x32xf32>
    %28 = vector.extract_strided_slice %20 {offsets = [0, 96], sizes = [8, 32], strides = [1, 1]} : vector<8x128xf32> to vector<8x32xf32>
    %29 = arith.mulf %22, %11 : vector<8x32xf32>
    %30 = arith.mulf %21, %27 : vector<8x32xf32>
    %31 = arith.addf %29, %30 : vector<8x32xf32>
    %32 = math.tanh %31 : vector<8x32xf32>
    %33 = arith.mulf %28, %32 : vector<8x32xf32>
    %34 = vector.extract_strided_slice %5 {offsets = [8, 0], sizes = [8, 128], strides = [1, 1]} : vector<64x128xf32> to vector<8x128xf32>
    %cst_19 = arith.constant dense<0.000000e+00> : vector<8x128xf32>
    %35 = tpu.matmul %33, %6, %cst_19 {dimension_numbers = #tpu.dot_dimension_numbers<[1], [0], [0], [1], [0, 0, 1, 1], [], []>} : vector<8x32xf32>, vector<32x128xf32>, vector<8x128xf32> -> vector<8x128xf32>
    %36 = arith.addf %34, %35 : vector<8x128xf32>
    %37 = arith.negf %36 : vector<8x128xf32>
    %38 = math.exp %37 : vector<8x128xf32>
    %cst_20 = arith.constant 1.000000e+00 : f32
    %39 = vector.broadcast %cst_20 : f32 to vector<8x128xf32>
    %40 = arith.addf %39, %38 : vector<8x128xf32>
    %41 = arith.divf %39, %40 : vector<8x128xf32>
    %42 = vector.extract_strided_slice %41 {offsets = [0, 0], sizes = [8, 32], strides = [1, 1]} : vector<8x128xf32> to vector<8x32xf32>
    %43 = vector.extract_strided_slice %41 {offsets = [0, 32], sizes = [8, 32], strides = [1, 1]} : vector<8x128xf32> to vector<8x32xf32>
    %44 = vector.extract_strided_slice %41 {offsets = [0, 64], sizes = [8, 32], strides = [1, 1]} : vector<8x128xf32> to vector<8x32xf32>
    %cst_21 = arith.constant 2.000000e+00 : f32
    %45 = vector.broadcast %cst_21 : f32 to vector<8x32xf32>
    %46 = arith.mulf %45, %44 : vector<8x32xf32>
    %cst_22 = arith.constant 1.000000e+00 : f32
    %47 = vector.broadcast %cst_22 : f32 to vector<8x32xf32>
    %48 = arith.subf %46, %47 : vector<8x32xf32>
    %49 = vector.extract_strided_slice %41 {offsets = [0, 96], sizes = [8, 32], strides = [1, 1]} : vector<8x128xf32> to vector<8x32xf32>
    %50 = arith.mulf %43, %31 : vector<8x32xf32>
    %51 = arith.mulf %42, %48 : vector<8x32xf32>
    %52 = arith.addf %50, %51 : vector<8x32xf32>
    %53 = math.tanh %52 : vector<8x32xf32>
    %54 = arith.mulf %49, %53 : vector<8x32xf32>
    %55 = tpu.concatenate %10, %33 in 1 : vector<8x32xf32>, vector<8x32xf32> -> vector<8x64xf32>
    %cst_23 = arith.constant dense<0.000000e+00> : vector<8x128xf32>
    %56 = tpu.matmul %55, %7, %cst_23 {dimension_numbers = #tpu.dot_dimension_numbers<[1], [0], [0], [1], [0, 0, 1, 1], [], []>} : vector<8x64xf32>, vector<64x128xf32>, vector<8x128xf32> -> vector<8x128xf32>
    %57 = vector.broadcast %8 : vector<1x128xf32> to vector<8x128xf32>
    %58 = arith.addf %56, %57 : vector<8x128xf32>
    %59 = arith.negf %58 : vector<8x128xf32>
    %60 = math.exp %59 : vector<8x128xf32>
    %cst_24 = arith.constant 1.000000e+00 : f32
    %61 = vector.broadcast %cst_24 : f32 to vector<8x128xf32>
    %62 = arith.addf %61, %60 : vector<8x128xf32>
    %63 = arith.divf %61, %62 : vector<8x128xf32>
    %64 = vector.extract_strided_slice %63 {offsets = [0, 0], sizes = [8, 32], strides = [1, 1]} : vector<8x128xf32> to vector<8x32xf32>
    %65 = vector.extract_strided_slice %63 {offsets = [0, 32], sizes = [8, 32], strides = [1, 1]} : vector<8x128xf32> to vector<8x32xf32>
    %66 = vector.extract_strided_slice %63 {offsets = [0, 64], sizes = [8, 32], strides = [1, 1]} : vector<8x128xf32> to vector<8x32xf32>
    %cst_25 = arith.constant 2.000000e+00 : f32
    %67 = vector.broadcast %cst_25 : f32 to vector<8x32xf32>
    %68 = arith.mulf %67, %66 : vector<8x32xf32>
    %cst_26 = arith.constant 1.000000e+00 : f32
    %69 = vector.broadcast %cst_26 : f32 to vector<8x32xf32>
    %70 = arith.subf %68, %69 : vector<8x32xf32>
    %71 = vector.extract_strided_slice %63 {offsets = [0, 96], sizes = [8, 32], strides = [1, 1]} : vector<8x128xf32> to vector<8x32xf32>
    %72 = arith.mulf %65, %12 : vector<8x32xf32>
    %73 = arith.mulf %64, %70 : vector<8x32xf32>
    %74 = arith.addf %72, %73 : vector<8x32xf32>
    %75 = math.tanh %74 : vector<8x32xf32>
    %76 = arith.mulf %71, %75 : vector<8x32xf32>
    %77 = vector.extract_strided_slice %5 {offsets = [16, 0], sizes = [8, 128], strides = [1, 1]} : vector<64x128xf32> to vector<8x128xf32>
    %cst_27 = arith.constant dense<0.000000e+00> : vector<8x128xf32>
    %78 = tpu.matmul %54, %6, %cst_27 {dimension_numbers = #tpu.dot_dimension_numbers<[1], [0], [0], [1], [0, 0, 1, 1], [], []>} : vector<8x32xf32>, vector<32x128xf32>, vector<8x128xf32> -> vector<8x128xf32>
    %79 = arith.addf %77, %78 : vector<8x128xf32>
    %80 = arith.negf %79 : vector<8x128xf32>
    %81 = math.exp %80 : vector<8x128xf32>
    %cst_28 = arith.constant 1.000000e+00 : f32
    %82 = vector.broadcast %cst_28 : f32 to vector<8x128xf32>
    %83 = arith.addf %82, %81 : vector<8x128xf32>
    %84 = arith.divf %82, %83 : vector<8x128xf32>
    %85 = vector.extract_strided_slice %84 {offsets = [0, 0], sizes = [8, 32], strides = [1, 1]} : vector<8x128xf32> to vector<8x32xf32>
    %86 = vector.extract_strided_slice %84 {offsets = [0, 32], sizes = [8, 32], strides = [1, 1]} : vector<8x128xf32> to vector<8x32xf32>
    %87 = vector.extract_strided_slice %84 {offsets = [0, 64], sizes = [8, 32], strides = [1, 1]} : vector<8x128xf32> to vector<8x32xf32>
    %cst_29 = arith.constant 2.000000e+00 : f32
    %88 = vector.broadcast %cst_29 : f32 to vector<8x32xf32>
    %89 = arith.mulf %88, %87 : vector<8x32xf32>
    %cst_30 = arith.constant 1.000000e+00 : f32
    %90 = vector.broadcast %cst_30 : f32 to vector<8x32xf32>
    %91 = arith.subf %89, %90 : vector<8x32xf32>
    %92 = vector.extract_strided_slice %84 {offsets = [0, 96], sizes = [8, 32], strides = [1, 1]} : vector<8x128xf32> to vector<8x32xf32>
    %93 = arith.mulf %86, %52 : vector<8x32xf32>
    %94 = arith.mulf %85, %91 : vector<8x32xf32>
    %95 = arith.addf %93, %94 : vector<8x32xf32>
    %96 = math.tanh %95 : vector<8x32xf32>
    %97 = arith.mulf %92, %96 : vector<8x32xf32>
    %98 = tpu.concatenate %76, %54 in 1 : vector<8x32xf32>, vector<8x32xf32> -> vector<8x64xf32>
    %cst_31 = arith.constant dense<0.000000e+00> : vector<8x128xf32>
    %99 = tpu.matmul %98, %7, %cst_31 {dimension_numbers = #tpu.dot_dimension_numbers<[1], [0], [0], [1], [0, 0, 1, 1], [], []>} : vector<8x64xf32>, vector<64x128xf32>, vector<8x128xf32> -> vector<8x128xf32>
    %100 = vector.broadcast %8 : vector<1x128xf32> to vector<8x128xf32>
    %101 = arith.addf %99, %100 : vector<8x128xf32>
    %102 = arith.negf %101 : vector<8x128xf32>
    %103 = math.exp %102 : vector<8x128xf32>
    %cst_32 = arith.constant 1.000000e+00 : f32
    %104 = vector.broadcast %cst_32 : f32 to vector<8x128xf32>
    %105 = arith.addf %104, %103 : vector<8x128xf32>
    %106 = arith.divf %104, %105 : vector<8x128xf32>
    %107 = vector.extract_strided_slice %106 {offsets = [0, 0], sizes = [8, 32], strides = [1, 1]} : vector<8x128xf32> to vector<8x32xf32>
    %108 = vector.extract_strided_slice %106 {offsets = [0, 32], sizes = [8, 32], strides = [1, 1]} : vector<8x128xf32> to vector<8x32xf32>
    %109 = vector.extract_strided_slice %106 {offsets = [0, 64], sizes = [8, 32], strides = [1, 1]} : vector<8x128xf32> to vector<8x32xf32>
    %cst_33 = arith.constant 2.000000e+00 : f32
    %110 = vector.broadcast %cst_33 : f32 to vector<8x32xf32>
    %111 = arith.mulf %110, %109 : vector<8x32xf32>
    %cst_34 = arith.constant 1.000000e+00 : f32
    %112 = vector.broadcast %cst_34 : f32 to vector<8x32xf32>
    %113 = arith.subf %111, %112 : vector<8x32xf32>
    %114 = vector.extract_strided_slice %106 {offsets = [0, 96], sizes = [8, 32], strides = [1, 1]} : vector<8x128xf32> to vector<8x32xf32>
    %115 = arith.mulf %108, %74 : vector<8x32xf32>
    %116 = arith.mulf %107, %113 : vector<8x32xf32>
    %117 = arith.addf %115, %116 : vector<8x32xf32>
    %118 = math.tanh %117 : vector<8x32xf32>
    %119 = arith.mulf %114, %118 : vector<8x32xf32>
    %120 = vector.extract_strided_slice %5 {offsets = [24, 0], sizes = [8, 128], strides = [1, 1]} : vector<64x128xf32> to vector<8x128xf32>
    %cst_35 = arith.constant dense<0.000000e+00> : vector<8x128xf32>
    %121 = tpu.matmul %97, %6, %cst_35 {dimension_numbers = #tpu.dot_dimension_numbers<[1], [0], [0], [1], [0, 0, 1, 1], [], []>} : vector<8x32xf32>, vector<32x128xf32>, vector<8x128xf32> -> vector<8x128xf32>
    %122 = arith.addf %120, %121 : vector<8x128xf32>
    %123 = arith.negf %122 : vector<8x128xf32>
    %124 = math.exp %123 : vector<8x128xf32>
    %cst_36 = arith.constant 1.000000e+00 : f32
    %125 = vector.broadcast %cst_36 : f32 to vector<8x128xf32>
    %126 = arith.addf %125, %124 : vector<8x128xf32>
    %127 = arith.divf %125, %126 : vector<8x128xf32>
    %128 = vector.extract_strided_slice %127 {offsets = [0, 0], sizes = [8, 32], strides = [1, 1]} : vector<8x128xf32> to vector<8x32xf32>
    %129 = vector.extract_strided_slice %127 {offsets = [0, 32], sizes = [8, 32], strides = [1, 1]} : vector<8x128xf32> to vector<8x32xf32>
    %130 = vector.extract_strided_slice %127 {offsets = [0, 64], sizes = [8, 32], strides = [1, 1]} : vector<8x128xf32> to vector<8x32xf32>
    %cst_37 = arith.constant 2.000000e+00 : f32
    %131 = vector.broadcast %cst_37 : f32 to vector<8x32xf32>
    %132 = arith.mulf %131, %130 : vector<8x32xf32>
    %cst_38 = arith.constant 1.000000e+00 : f32
    %133 = vector.broadcast %cst_38 : f32 to vector<8x32xf32>
    %134 = arith.subf %132, %133 : vector<8x32xf32>
    %135 = vector.extract_strided_slice %127 {offsets = [0, 96], sizes = [8, 32], strides = [1, 1]} : vector<8x128xf32> to vector<8x32xf32>
    %136 = arith.mulf %129, %95 : vector<8x32xf32>
    %137 = arith.mulf %128, %134 : vector<8x32xf32>
    %138 = arith.addf %136, %137 : vector<8x32xf32>
    %139 = math.tanh %138 : vector<8x32xf32>
    %140 = arith.mulf %135, %139 : vector<8x32xf32>
    %141 = tpu.concatenate %119, %97 in 1 : vector<8x32xf32>, vector<8x32xf32> -> vector<8x64xf32>
    %cst_39 = arith.constant dense<0.000000e+00> : vector<8x128xf32>
    %142 = tpu.matmul %141, %7, %cst_39 {dimension_numbers = #tpu.dot_dimension_numbers<[1], [0], [0], [1], [0, 0, 1, 1], [], []>} : vector<8x64xf32>, vector<64x128xf32>, vector<8x128xf32> -> vector<8x128xf32>
    %143 = vector.broadcast %8 : vector<1x128xf32> to vector<8x128xf32>
    %144 = arith.addf %142, %143 : vector<8x128xf32>
    %145 = arith.negf %144 : vector<8x128xf32>
    %146 = math.exp %145 : vector<8x128xf32>
    %cst_40 = arith.constant 1.000000e+00 : f32
    %147 = vector.broadcast %cst_40 : f32 to vector<8x128xf32>
    %148 = arith.addf %147, %146 : vector<8x128xf32>
    %149 = arith.divf %147, %148 : vector<8x128xf32>
    %150 = vector.extract_strided_slice %149 {offsets = [0, 0], sizes = [8, 32], strides = [1, 1]} : vector<8x128xf32> to vector<8x32xf32>
    %151 = vector.extract_strided_slice %149 {offsets = [0, 32], sizes = [8, 32], strides = [1, 1]} : vector<8x128xf32> to vector<8x32xf32>
    %152 = vector.extract_strided_slice %149 {offsets = [0, 64], sizes = [8, 32], strides = [1, 1]} : vector<8x128xf32> to vector<8x32xf32>
    %cst_41 = arith.constant 2.000000e+00 : f32
    %153 = vector.broadcast %cst_41 : f32 to vector<8x32xf32>
    %154 = arith.mulf %153, %152 : vector<8x32xf32>
    %cst_42 = arith.constant 1.000000e+00 : f32
    %155 = vector.broadcast %cst_42 : f32 to vector<8x32xf32>
    %156 = arith.subf %154, %155 : vector<8x32xf32>
    %157 = vector.extract_strided_slice %149 {offsets = [0, 96], sizes = [8, 32], strides = [1, 1]} : vector<8x128xf32> to vector<8x32xf32>
    %158 = arith.mulf %151, %117 : vector<8x32xf32>
    %159 = arith.mulf %150, %156 : vector<8x32xf32>
    %160 = arith.addf %158, %159 : vector<8x32xf32>
    %161 = math.tanh %160 : vector<8x32xf32>
    %162 = arith.mulf %157, %161 : vector<8x32xf32>
    %163 = vector.extract_strided_slice %5 {offsets = [32, 0], sizes = [8, 128], strides = [1, 1]} : vector<64x128xf32> to vector<8x128xf32>
    %cst_43 = arith.constant dense<0.000000e+00> : vector<8x128xf32>
    %164 = tpu.matmul %140, %6, %cst_43 {dimension_numbers = #tpu.dot_dimension_numbers<[1], [0], [0], [1], [0, 0, 1, 1], [], []>} : vector<8x32xf32>, vector<32x128xf32>, vector<8x128xf32> -> vector<8x128xf32>
    %165 = arith.addf %163, %164 : vector<8x128xf32>
    %166 = arith.negf %165 : vector<8x128xf32>
    %167 = math.exp %166 : vector<8x128xf32>
    %cst_44 = arith.constant 1.000000e+00 : f32
    %168 = vector.broadcast %cst_44 : f32 to vector<8x128xf32>
    %169 = arith.addf %168, %167 : vector<8x128xf32>
    %170 = arith.divf %168, %169 : vector<8x128xf32>
    %171 = vector.extract_strided_slice %170 {offsets = [0, 0], sizes = [8, 32], strides = [1, 1]} : vector<8x128xf32> to vector<8x32xf32>
    %172 = vector.extract_strided_slice %170 {offsets = [0, 32], sizes = [8, 32], strides = [1, 1]} : vector<8x128xf32> to vector<8x32xf32>
    %173 = vector.extract_strided_slice %170 {offsets = [0, 64], sizes = [8, 32], strides = [1, 1]} : vector<8x128xf32> to vector<8x32xf32>
    %cst_45 = arith.constant 2.000000e+00 : f32
    %174 = vector.broadcast %cst_45 : f32 to vector<8x32xf32>
    %175 = arith.mulf %174, %173 : vector<8x32xf32>
    %cst_46 = arith.constant 1.000000e+00 : f32
    %176 = vector.broadcast %cst_46 : f32 to vector<8x32xf32>
    %177 = arith.subf %175, %176 : vector<8x32xf32>
    %178 = vector.extract_strided_slice %170 {offsets = [0, 96], sizes = [8, 32], strides = [1, 1]} : vector<8x128xf32> to vector<8x32xf32>
    %179 = arith.mulf %172, %138 : vector<8x32xf32>
    %180 = arith.mulf %171, %177 : vector<8x32xf32>
    %181 = arith.addf %179, %180 : vector<8x32xf32>
    %182 = math.tanh %181 : vector<8x32xf32>
    %183 = arith.mulf %178, %182 : vector<8x32xf32>
    %184 = tpu.concatenate %162, %140 in 1 : vector<8x32xf32>, vector<8x32xf32> -> vector<8x64xf32>
    %cst_47 = arith.constant dense<0.000000e+00> : vector<8x128xf32>
    %185 = tpu.matmul %184, %7, %cst_47 {dimension_numbers = #tpu.dot_dimension_numbers<[1], [0], [0], [1], [0, 0, 1, 1], [], []>} : vector<8x64xf32>, vector<64x128xf32>, vector<8x128xf32> -> vector<8x128xf32>
    %186 = vector.broadcast %8 : vector<1x128xf32> to vector<8x128xf32>
    %187 = arith.addf %185, %186 : vector<8x128xf32>
    %188 = arith.negf %187 : vector<8x128xf32>
    %189 = math.exp %188 : vector<8x128xf32>
    %cst_48 = arith.constant 1.000000e+00 : f32
    %190 = vector.broadcast %cst_48 : f32 to vector<8x128xf32>
    %191 = arith.addf %190, %189 : vector<8x128xf32>
    %192 = arith.divf %190, %191 : vector<8x128xf32>
    %193 = vector.extract_strided_slice %192 {offsets = [0, 0], sizes = [8, 32], strides = [1, 1]} : vector<8x128xf32> to vector<8x32xf32>
    %194 = vector.extract_strided_slice %192 {offsets = [0, 32], sizes = [8, 32], strides = [1, 1]} : vector<8x128xf32> to vector<8x32xf32>
    %195 = vector.extract_strided_slice %192 {offsets = [0, 64], sizes = [8, 32], strides = [1, 1]} : vector<8x128xf32> to vector<8x32xf32>
    %cst_49 = arith.constant 2.000000e+00 : f32
    %196 = vector.broadcast %cst_49 : f32 to vector<8x32xf32>
    %197 = arith.mulf %196, %195 : vector<8x32xf32>
    %cst_50 = arith.constant 1.000000e+00 : f32
    %198 = vector.broadcast %cst_50 : f32 to vector<8x32xf32>
    %199 = arith.subf %197, %198 : vector<8x32xf32>
    %200 = vector.extract_strided_slice %192 {offsets = [0, 96], sizes = [8, 32], strides = [1, 1]} : vector<8x128xf32> to vector<8x32xf32>
    %201 = arith.mulf %194, %160 : vector<8x32xf32>
    %202 = arith.mulf %193, %199 : vector<8x32xf32>
    %203 = arith.addf %201, %202 : vector<8x32xf32>
    %204 = math.tanh %203 : vector<8x32xf32>
    %205 = arith.mulf %200, %204 : vector<8x32xf32>
    %206 = vector.extract_strided_slice %5 {offsets = [40, 0], sizes = [8, 128], strides = [1, 1]} : vector<64x128xf32> to vector<8x128xf32>
    %cst_51 = arith.constant dense<0.000000e+00> : vector<8x128xf32>
    %207 = tpu.matmul %183, %6, %cst_51 {dimension_numbers = #tpu.dot_dimension_numbers<[1], [0], [0], [1], [0, 0, 1, 1], [], []>} : vector<8x32xf32>, vector<32x128xf32>, vector<8x128xf32> -> vector<8x128xf32>
    %208 = arith.addf %206, %207 : vector<8x128xf32>
    %209 = arith.negf %208 : vector<8x128xf32>
    %210 = math.exp %209 : vector<8x128xf32>
    %cst_52 = arith.constant 1.000000e+00 : f32
    %211 = vector.broadcast %cst_52 : f32 to vector<8x128xf32>
    %212 = arith.addf %211, %210 : vector<8x128xf32>
    %213 = arith.divf %211, %212 : vector<8x128xf32>
    %214 = vector.extract_strided_slice %213 {offsets = [0, 0], sizes = [8, 32], strides = [1, 1]} : vector<8x128xf32> to vector<8x32xf32>
    %215 = vector.extract_strided_slice %213 {offsets = [0, 32], sizes = [8, 32], strides = [1, 1]} : vector<8x128xf32> to vector<8x32xf32>
    %216 = vector.extract_strided_slice %213 {offsets = [0, 64], sizes = [8, 32], strides = [1, 1]} : vector<8x128xf32> to vector<8x32xf32>
    %cst_53 = arith.constant 2.000000e+00 : f32
    %217 = vector.broadcast %cst_53 : f32 to vector<8x32xf32>
    %218 = arith.mulf %217, %216 : vector<8x32xf32>
    %cst_54 = arith.constant 1.000000e+00 : f32
    %219 = vector.broadcast %cst_54 : f32 to vector<8x32xf32>
    %220 = arith.subf %218, %219 : vector<8x32xf32>
    %221 = vector.extract_strided_slice %213 {offsets = [0, 96], sizes = [8, 32], strides = [1, 1]} : vector<8x128xf32> to vector<8x32xf32>
    %222 = arith.mulf %215, %181 : vector<8x32xf32>
    %223 = arith.mulf %214, %220 : vector<8x32xf32>
    %224 = arith.addf %222, %223 : vector<8x32xf32>
    %225 = math.tanh %224 : vector<8x32xf32>
    %226 = arith.mulf %221, %225 : vector<8x32xf32>
    %227 = tpu.concatenate %205, %183 in 1 : vector<8x32xf32>, vector<8x32xf32> -> vector<8x64xf32>
    %cst_55 = arith.constant dense<0.000000e+00> : vector<8x128xf32>
    %228 = tpu.matmul %227, %7, %cst_55 {dimension_numbers = #tpu.dot_dimension_numbers<[1], [0], [0], [1], [0, 0, 1, 1], [], []>} : vector<8x64xf32>, vector<64x128xf32>, vector<8x128xf32> -> vector<8x128xf32>
    %229 = vector.broadcast %8 : vector<1x128xf32> to vector<8x128xf32>
    %230 = arith.addf %228, %229 : vector<8x128xf32>
    %231 = arith.negf %230 : vector<8x128xf32>
    %232 = math.exp %231 : vector<8x128xf32>
    %cst_56 = arith.constant 1.000000e+00 : f32
    %233 = vector.broadcast %cst_56 : f32 to vector<8x128xf32>
    %234 = arith.addf %233, %232 : vector<8x128xf32>
    %235 = arith.divf %233, %234 : vector<8x128xf32>
    %236 = vector.extract_strided_slice %235 {offsets = [0, 0], sizes = [8, 32], strides = [1, 1]} : vector<8x128xf32> to vector<8x32xf32>
    %237 = vector.extract_strided_slice %235 {offsets = [0, 32], sizes = [8, 32], strides = [1, 1]} : vector<8x128xf32> to vector<8x32xf32>
    %238 = vector.extract_strided_slice %235 {offsets = [0, 64], sizes = [8, 32], strides = [1, 1]} : vector<8x128xf32> to vector<8x32xf32>
    %cst_57 = arith.constant 2.000000e+00 : f32
    %239 = vector.broadcast %cst_57 : f32 to vector<8x32xf32>
    %240 = arith.mulf %239, %238 : vector<8x32xf32>
    %cst_58 = arith.constant 1.000000e+00 : f32
    %241 = vector.broadcast %cst_58 : f32 to vector<8x32xf32>
    %242 = arith.subf %240, %241 : vector<8x32xf32>
    %243 = vector.extract_strided_slice %235 {offsets = [0, 96], sizes = [8, 32], strides = [1, 1]} : vector<8x128xf32> to vector<8x32xf32>
    %244 = arith.mulf %237, %203 : vector<8x32xf32>
    %245 = arith.mulf %236, %242 : vector<8x32xf32>
    %246 = arith.addf %244, %245 : vector<8x32xf32>
    %247 = math.tanh %246 : vector<8x32xf32>
    %248 = arith.mulf %243, %247 : vector<8x32xf32>
    %249 = vector.extract_strided_slice %5 {offsets = [48, 0], sizes = [8, 128], strides = [1, 1]} : vector<64x128xf32> to vector<8x128xf32>
    %cst_59 = arith.constant dense<0.000000e+00> : vector<8x128xf32>
    %250 = tpu.matmul %226, %6, %cst_59 {dimension_numbers = #tpu.dot_dimension_numbers<[1], [0], [0], [1], [0, 0, 1, 1], [], []>} : vector<8x32xf32>, vector<32x128xf32>, vector<8x128xf32> -> vector<8x128xf32>
    %251 = arith.addf %249, %250 : vector<8x128xf32>
    %252 = arith.negf %251 : vector<8x128xf32>
    %253 = math.exp %252 : vector<8x128xf32>
    %cst_60 = arith.constant 1.000000e+00 : f32
    %254 = vector.broadcast %cst_60 : f32 to vector<8x128xf32>
    %255 = arith.addf %254, %253 : vector<8x128xf32>
    %256 = arith.divf %254, %255 : vector<8x128xf32>
    %257 = vector.extract_strided_slice %256 {offsets = [0, 0], sizes = [8, 32], strides = [1, 1]} : vector<8x128xf32> to vector<8x32xf32>
    %258 = vector.extract_strided_slice %256 {offsets = [0, 32], sizes = [8, 32], strides = [1, 1]} : vector<8x128xf32> to vector<8x32xf32>
    %259 = vector.extract_strided_slice %256 {offsets = [0, 64], sizes = [8, 32], strides = [1, 1]} : vector<8x128xf32> to vector<8x32xf32>
    %cst_61 = arith.constant 2.000000e+00 : f32
    %260 = vector.broadcast %cst_61 : f32 to vector<8x32xf32>
    %261 = arith.mulf %260, %259 : vector<8x32xf32>
    %cst_62 = arith.constant 1.000000e+00 : f32
    %262 = vector.broadcast %cst_62 : f32 to vector<8x32xf32>
    %263 = arith.subf %261, %262 : vector<8x32xf32>
    %264 = vector.extract_strided_slice %256 {offsets = [0, 96], sizes = [8, 32], strides = [1, 1]} : vector<8x128xf32> to vector<8x32xf32>
    %265 = arith.mulf %258, %224 : vector<8x32xf32>
    %266 = arith.mulf %257, %263 : vector<8x32xf32>
    %267 = arith.addf %265, %266 : vector<8x32xf32>
    %268 = math.tanh %267 : vector<8x32xf32>
    %269 = arith.mulf %264, %268 : vector<8x32xf32>
    %270 = tpu.concatenate %248, %226 in 1 : vector<8x32xf32>, vector<8x32xf32> -> vector<8x64xf32>
    %cst_63 = arith.constant dense<0.000000e+00> : vector<8x128xf32>
    %271 = tpu.matmul %270, %7, %cst_63 {dimension_numbers = #tpu.dot_dimension_numbers<[1], [0], [0], [1], [0, 0, 1, 1], [], []>} : vector<8x64xf32>, vector<64x128xf32>, vector<8x128xf32> -> vector<8x128xf32>
    %272 = vector.broadcast %8 : vector<1x128xf32> to vector<8x128xf32>
    %273 = arith.addf %271, %272 : vector<8x128xf32>
    %274 = arith.negf %273 : vector<8x128xf32>
    %275 = math.exp %274 : vector<8x128xf32>
    %cst_64 = arith.constant 1.000000e+00 : f32
    %276 = vector.broadcast %cst_64 : f32 to vector<8x128xf32>
    %277 = arith.addf %276, %275 : vector<8x128xf32>
    %278 = arith.divf %276, %277 : vector<8x128xf32>
    %279 = vector.extract_strided_slice %278 {offsets = [0, 0], sizes = [8, 32], strides = [1, 1]} : vector<8x128xf32> to vector<8x32xf32>
    %280 = vector.extract_strided_slice %278 {offsets = [0, 32], sizes = [8, 32], strides = [1, 1]} : vector<8x128xf32> to vector<8x32xf32>
    %281 = vector.extract_strided_slice %278 {offsets = [0, 64], sizes = [8, 32], strides = [1, 1]} : vector<8x128xf32> to vector<8x32xf32>
    %cst_65 = arith.constant 2.000000e+00 : f32
    %282 = vector.broadcast %cst_65 : f32 to vector<8x32xf32>
    %283 = arith.mulf %282, %281 : vector<8x32xf32>
    %cst_66 = arith.constant 1.000000e+00 : f32
    %284 = vector.broadcast %cst_66 : f32 to vector<8x32xf32>
    %285 = arith.subf %283, %284 : vector<8x32xf32>
    %286 = vector.extract_strided_slice %278 {offsets = [0, 96], sizes = [8, 32], strides = [1, 1]} : vector<8x128xf32> to vector<8x32xf32>
    %287 = arith.mulf %280, %246 : vector<8x32xf32>
    %288 = arith.mulf %279, %285 : vector<8x32xf32>
    %289 = arith.addf %287, %288 : vector<8x32xf32>
    %290 = math.tanh %289 : vector<8x32xf32>
    %291 = arith.mulf %286, %290 : vector<8x32xf32>
    %292 = vector.extract_strided_slice %5 {offsets = [56, 0], sizes = [8, 128], strides = [1, 1]} : vector<64x128xf32> to vector<8x128xf32>
    %cst_67 = arith.constant dense<0.000000e+00> : vector<8x128xf32>
    %293 = tpu.matmul %269, %6, %cst_67 {dimension_numbers = #tpu.dot_dimension_numbers<[1], [0], [0], [1], [0, 0, 1, 1], [], []>} : vector<8x32xf32>, vector<32x128xf32>, vector<8x128xf32> -> vector<8x128xf32>
    %294 = arith.addf %292, %293 : vector<8x128xf32>
    %295 = arith.negf %294 : vector<8x128xf32>
    %296 = math.exp %295 : vector<8x128xf32>
    %cst_68 = arith.constant 1.000000e+00 : f32
    %297 = vector.broadcast %cst_68 : f32 to vector<8x128xf32>
    %298 = arith.addf %297, %296 : vector<8x128xf32>
    %299 = arith.divf %297, %298 : vector<8x128xf32>
    %300 = vector.extract_strided_slice %299 {offsets = [0, 0], sizes = [8, 32], strides = [1, 1]} : vector<8x128xf32> to vector<8x32xf32>
    %301 = vector.extract_strided_slice %299 {offsets = [0, 32], sizes = [8, 32], strides = [1, 1]} : vector<8x128xf32> to vector<8x32xf32>
    %302 = vector.extract_strided_slice %299 {offsets = [0, 64], sizes = [8, 32], strides = [1, 1]} : vector<8x128xf32> to vector<8x32xf32>
    %cst_69 = arith.constant 2.000000e+00 : f32
    %303 = vector.broadcast %cst_69 : f32 to vector<8x32xf32>
    %304 = arith.mulf %303, %302 : vector<8x32xf32>
    %cst_70 = arith.constant 1.000000e+00 : f32
    %305 = vector.broadcast %cst_70 : f32 to vector<8x32xf32>
    %306 = arith.subf %304, %305 : vector<8x32xf32>
    %307 = vector.extract_strided_slice %299 {offsets = [0, 96], sizes = [8, 32], strides = [1, 1]} : vector<8x128xf32> to vector<8x32xf32>
    %308 = arith.mulf %301, %267 : vector<8x32xf32>
    %309 = arith.mulf %300, %306 : vector<8x32xf32>
    %310 = arith.addf %308, %309 : vector<8x32xf32>
    %311 = math.tanh %310 : vector<8x32xf32>
    %312 = arith.mulf %307, %311 : vector<8x32xf32>
    %313 = tpu.concatenate %291, %269 in 1 : vector<8x32xf32>, vector<8x32xf32> -> vector<8x64xf32>
    %cst_71 = arith.constant dense<0.000000e+00> : vector<8x128xf32>
    %314 = tpu.matmul %313, %7, %cst_71 {dimension_numbers = #tpu.dot_dimension_numbers<[1], [0], [0], [1], [0, 0, 1, 1], [], []>} : vector<8x64xf32>, vector<64x128xf32>, vector<8x128xf32> -> vector<8x128xf32>
    %315 = vector.broadcast %8 : vector<1x128xf32> to vector<8x128xf32>
    %316 = arith.addf %314, %315 : vector<8x128xf32>
    %317 = arith.negf %316 : vector<8x128xf32>
    %318 = math.exp %317 : vector<8x128xf32>
    %cst_72 = arith.constant 1.000000e+00 : f32
    %319 = vector.broadcast %cst_72 : f32 to vector<8x128xf32>
    %320 = arith.addf %319, %318 : vector<8x128xf32>
    %321 = arith.divf %319, %320 : vector<8x128xf32>
    %322 = vector.extract_strided_slice %321 {offsets = [0, 0], sizes = [8, 32], strides = [1, 1]} : vector<8x128xf32> to vector<8x32xf32>
    %323 = vector.extract_strided_slice %321 {offsets = [0, 32], sizes = [8, 32], strides = [1, 1]} : vector<8x128xf32> to vector<8x32xf32>
    %324 = vector.extract_strided_slice %321 {offsets = [0, 64], sizes = [8, 32], strides = [1, 1]} : vector<8x128xf32> to vector<8x32xf32>
    %cst_73 = arith.constant 2.000000e+00 : f32
    %325 = vector.broadcast %cst_73 : f32 to vector<8x32xf32>
    %326 = arith.mulf %325, %324 : vector<8x32xf32>
    %cst_74 = arith.constant 1.000000e+00 : f32
    %327 = vector.broadcast %cst_74 : f32 to vector<8x32xf32>
    %328 = arith.subf %326, %327 : vector<8x32xf32>
    %329 = vector.extract_strided_slice %321 {offsets = [0, 96], sizes = [8, 32], strides = [1, 1]} : vector<8x128xf32> to vector<8x32xf32>
    %330 = arith.mulf %323, %289 : vector<8x32xf32>
    %331 = arith.mulf %322, %328 : vector<8x32xf32>
    %332 = arith.addf %330, %331 : vector<8x32xf32>
    %333 = math.tanh %332 : vector<8x32xf32>
    %334 = arith.mulf %329, %333 : vector<8x32xf32>
    %335 = tpu.concatenate %334, %312 in 1 : vector<8x32xf32>, vector<8x32xf32> -> vector<8x64xf32>
    %cst_75 = arith.constant dense<0.000000e+00> : vector<8x128xf32>
    %336 = tpu.matmul %335, %7, %cst_75 {dimension_numbers = #tpu.dot_dimension_numbers<[1], [0], [0], [1], [0, 0, 1, 1], [], []>} : vector<8x64xf32>, vector<64x128xf32>, vector<8x128xf32> -> vector<8x128xf32>
    %337 = vector.broadcast %8 : vector<1x128xf32> to vector<8x128xf32>
    %338 = arith.addf %336, %337 : vector<8x128xf32>
    %339 = arith.negf %338 : vector<8x128xf32>
    %340 = math.exp %339 : vector<8x128xf32>
    %cst_76 = arith.constant 1.000000e+00 : f32
    %341 = vector.broadcast %cst_76 : f32 to vector<8x128xf32>
    %342 = arith.addf %341, %340 : vector<8x128xf32>
    %343 = arith.divf %341, %342 : vector<8x128xf32>
    %344 = vector.extract_strided_slice %343 {offsets = [0, 0], sizes = [8, 32], strides = [1, 1]} : vector<8x128xf32> to vector<8x32xf32>
    %345 = vector.extract_strided_slice %343 {offsets = [0, 32], sizes = [8, 32], strides = [1, 1]} : vector<8x128xf32> to vector<8x32xf32>
    %346 = vector.extract_strided_slice %343 {offsets = [0, 64], sizes = [8, 32], strides = [1, 1]} : vector<8x128xf32> to vector<8x32xf32>
    %cst_77 = arith.constant 2.000000e+00 : f32
    %347 = vector.broadcast %cst_77 : f32 to vector<8x32xf32>
    %348 = arith.mulf %347, %346 : vector<8x32xf32>
    %cst_78 = arith.constant 1.000000e+00 : f32
    %349 = vector.broadcast %cst_78 : f32 to vector<8x32xf32>
    %350 = arith.subf %348, %349 : vector<8x32xf32>
    %351 = vector.extract_strided_slice %343 {offsets = [0, 96], sizes = [8, 32], strides = [1, 1]} : vector<8x128xf32> to vector<8x32xf32>
    %352 = arith.mulf %345, %332 : vector<8x32xf32>
    %353 = arith.mulf %344, %350 : vector<8x32xf32>
    %354 = arith.addf %352, %353 : vector<8x32xf32>
    %355 = math.tanh %354 : vector<8x32xf32>
    %356 = arith.mulf %351, %355 : vector<8x32xf32>
    %c0_79 = arith.constant 0 : index
    %c0_80 = arith.constant 0 : index
    %357 = vector.load %arg6[%c0_79, %c0_80] : memref<32x128xf32, #tpu.memory_space<vmem>>, vector<32x128xf32>
    %cst_81 = arith.constant dense<0.000000e+00> : vector<8x128xf32>
    %358 = tpu.matmul %356, %357, %cst_81 {dimension_numbers = #tpu.dot_dimension_numbers<[1], [0], [0], [1], [0, 0, 1, 1], [], []>} : vector<8x32xf32>, vector<32x128xf32>, vector<8x128xf32> -> vector<8x128xf32>
    %c0_82 = arith.constant 0 : index
    %c0_83 = arith.constant 0 : index
    %359 = vector.load %arg7[%c0_82, %c0_83] : memref<1x128xf32, #tpu.memory_space<vmem>>, vector<1x128xf32>
    %360 = vector.broadcast %359 : vector<1x128xf32> to vector<8x128xf32>
    %361 = arith.addf %358, %360 : vector<8x128xf32>
    %c0_84 = arith.constant 0 : index
    %c0_85 = arith.constant 0 : index
    %362 = vector.load %arg8[%c0_84, %c0_85] : memref<8x128xf32, #tpu.memory_space<vmem>>, vector<8x128xf32>
    tpu.vector_store %arg8[%c0_84, %c0_85], %361 {strides = array<i32>} : memref<8x128xf32, #tpu.memory_space<vmem>>, vector<8x128xf32>,
    return
  }
}

</mosaic_0001>

<llo_original>
// kernel: vanilla_lstm_forward.1
$region0: #{vanilla_lstm_forward.1}
  #allocation0 [shape = 'u32[]', space=smem, size = 0x4, offset = 0x4, fixed_abs, tag = 'smem constant byte address 0x4 - core index']
  #allocation1 [shape = 'u32[144,128]{1,0:T(1,128)}', space=vmem, size = 0x12000, scoped, tag = 'internal scratch']
  %s0 = inlined_call_operand.vmem [shape: f32[64,8], index: 0, kind: input, shape index: {}]
  %s1 = inlined_call_operand.vmem [shape: f32[8,128], index: 1, kind: input, shape index: {}]
  %s2 = inlined_call_operand.vmem [shape: f32[32,128], index: 2, kind: input, shape index: {}]
  %s3 = inlined_call_operand.vmem [shape: f32[1,128], index: 3, kind: input, shape index: {}]
  %s4 = inlined_call_operand.vmem [shape: f32[64,128], index: 4, kind: input, shape index: {}]
  %s5 = inlined_call_operand.vmem [shape: f32[1,128], index: 5, kind: input, shape index: {}]
  %s6 = inlined_call_operand.vmem [shape: f32[32,128], index: 6, kind: input, shape index: {}]
  %s7 = inlined_call_operand.vmem [shape: f32[1,128], index: 7, kind: input, shape index: {}]
  %s8 = inlined_call_operand.vmem [shape: f32[8,128], index: 8, kind: output, shape index: {}]
  %s9 = sld [smem:[#allocation0]]
  $region42: #{vanilla_lstm_forward.1} parent=0
    _
  %s11 = ssub.s32 1, %s9
  %s12 = scalar_select 0, %s11, %s9
  // Predicated region
  $region2: #{vanilla_lstm_forward.1} parent=0 // pred_check
    _
  $region3: #{vanilla_lstm_forward.1} parent=0 // pred_check_branch
    %14 = sbr.rel (0) target = $region5
  $region4: #{vanilla_lstm_forward.1} parent=0 // pred_region
    _
  $region5: #{vanilla_lstm_forward.1} parent=0 // pred_fallthru
    _
  // Predicated region
  $region6: #{vanilla_lstm_forward.1} parent=0 // pred_check
    _
  $region7: #{vanilla_lstm_forward.1} parent=0 // pred_check_branch
    %16 = sbr.rel (0) target = $region9
  $region8: #{vanilla_lstm_forward.1} parent=0 // pred_region
    _
  $region9: #{vanilla_lstm_forward.1} parent=0 // pred_fallthru
    _
  // Predicated region
  $region10: #{vanilla_lstm_forward.1} parent=0 // pred_check
    _
  $region11: #{vanilla_lstm_forward.1} parent=0 // pred_check_branch
    %18 = sbr.rel (0) target = $region13
  $region12: #{vanilla_lstm_forward.1} parent=0 // pred_region
    _
  $region13: #{vanilla_lstm_forward.1} parent=0 // pred_fallthru
    _
  // Predicated region
  $region14: #{vanilla_lstm_forward.1} parent=0 // pred_check
    _
  $region15: #{vanilla_lstm_forward.1} parent=0 // pred_check_branch
    %20 = sbr.rel (0) target = $region17
  $region16: #{vanilla_lstm_forward.1} parent=0 // pred_region
    _
  $region17: #{vanilla_lstm_forward.1} parent=0 // pred_fallthru
    _
  // Predicated region
  $region18: #{vanilla_lstm_forward.1} parent=0 // pred_check
    _
  $region19: #{vanilla_lstm_forward.1} parent=0 // pred_check_branch
    %22 = sbr.rel (0) target = $region21
  $region20: #{vanilla_lstm_forward.1} parent=0 // pred_region
    _
  $region21: #{vanilla_lstm_forward.1} parent=0 // pred_fallthru
    _
  // Predicated region
  $region22: #{vanilla_lstm_forward.1} parent=0 // pred_check
    _
  $region23: #{vanilla_lstm_forward.1} parent=0 // pred_check_branch
    %24 = sbr.rel (0) target = $region25
  $region24: #{vanilla_lstm_forward.1} parent=0 // pred_region
    _
  $region25: #{vanilla_lstm_forward.1} parent=0 // pred_fallthru
    _
  // Predicated region
  $region26: #{vanilla_lstm_forward.1} parent=0 // pred_check
    _
  $region27: #{vanilla_lstm_forward.1} parent=0 // pred_check_branch
    %26 = sbr.rel (0) target = $region29
  $region28: #{vanilla_lstm_forward.1} parent=0 // pred_region
    _
  $region29: #{vanilla_lstm_forward.1} parent=0 // pred_fallthru
    _
  // Predicated region
  $region30: #{vanilla_lstm_forward.1} parent=0 // pred_check
    _
  $region31: #{vanilla_lstm_forward.1} parent=0 // pred_check_branch
    %28 = sbr.rel (0) target = $region33
  $region32: #{vanilla_lstm_forward.1} parent=0 // pred_region
    _
  $region33: #{vanilla_lstm_forward.1} parent=0 // pred_fallthru
    _
  %v29 = vld [vmem:[%s0] sm:$0xff]
  %v30 = vld [vmem:[%s0 + $0x8] sm:$0xff]
  %v31 = vld [vmem:[%s0 + $0x10] sm:$0xff]
  %v32 = vld [vmem:[%s0 + $0x18] sm:$0xff]
  %v33 = vld [vmem:[%s0 + $0x20] sm:$0xff]
  %v34 = vld [vmem:[%s0 + $0x28] sm:$0xff]
  %v35 = vld [vmem:[%s0 + $0x30] sm:$0xff]
  %v36 = vld [vmem:[%s0 + $0x38] sm:$0xff]
  %v37 = vld [vmem:[%s1] sm:$0xff]
  %v38 = vld [vmem:[%s3] sm:$0x1]
  %v40 = vlaneseq
  %v41 = vshrl.u32 %v40, 7
  %v42 = vsub.s32 0, %v41
  %v43 = vrot.slane %v38, %v42
  %vm45 = vcmask 64512
  %v47 = vsel %vm45, %v29, 0
  %v50 = vsel %vm45, %v30, 0
  %v53 = vsel %vm45, %v31, 0
  %v56 = vsel %vm45, %v32, 0
  %v59 = vsel %vm45, %v33, 0
  %v62 = vsel %vm45, %v34, 0
  %v65 = vsel %vm45, %v35, 0
  %v68 = vsel %vm45, %v36, 0
  %70 = vmatprep.subr.mxu0 0.0
  %71 = vmatpush1.msra.mxu0 %v37
  %72 = vmatprep.subr.mxu0 0.0
  %73 = vmatpush1.msra.mxu0 0.0
  %74 = vmatprep.subr.mxu0 0.0
  %75 = vmatpush1.msra.mxu0 0.0
  %76 = vmatprep.subr.mxu0 0.0
  %77 = vmatpush1.msra.mxu0 0.0
  %78 = vmatprep.subr.mxu0 0.0
  %79 = vmatpush1.msra.mxu0 0.0
  %80 = vmatprep.subr.mxu0 0.0
  %81 = vmatpush1.msra.mxu0 0.0
  %82 = vmatprep.subr.mxu0 0.0
  %83 = vmatpush1.msra.mxu0 0.0
  %84 = vmatprep.subr.mxu0 0.0
  %85 = vmatpush1.msra.mxu0 0.0
  %86 = vmatprep.subr.mxu0 0.0
  %87 = vmatpush1.msra.mxu0 0.0
  %88 = vmatprep.subr.mxu0 0.0
  %89 = vmatpush1.msra.mxu0 0.0
  %90 = vmatprep.subr.mxu0 0.0
  %91 = vmatpush1.msra.mxu0 0.0
  %92 = vmatprep.subr.mxu0 0.0
  %93 = vmatpush1.msra.mxu0 0.0
  %94 = vmatprep.subr.mxu0 0.0
  %95 = vmatpush1.msra.mxu0 0.0
  %96 = vmatprep.subr.mxu0 0.0
  %97 = vmatpush1.msra.mxu0 0.0
  %98 = vmatprep.subr.mxu0 0.0
  %99 = vmatpush1.msra.mxu0 0.0
  %100 = vmatprep.subr.mxu0 0.0
  %101 = vmatpush1.msra.mxu0 0.0
  %102 = vmatprep.subr.mxu0 0.0
  %103 = vmatpush1.msra.mxu0 0.0
  %104 = vmatprep.subr.mxu0 0.0
  %105 = vmatpush1.msra.mxu0 0.0
  %106 = vmatprep.subr.mxu0 0.0
  %107 = vmatpush1.msra.mxu0 0.0
  %108 = vmatprep.subr.mxu0 0.0
  %109 = vmatpush1.msra.mxu0 0.0
  %110 = vmatprep.subr.mxu0 0.0
  %111 = vmatpush1.msra.mxu0 0.0
  %112 = vmatprep.subr.mxu0 0.0
  %113 = vmatpush1.msra.mxu0 0.0
  %114 = vmatprep.subr.mxu0 0.0
  %115 = vmatpush1.msra.mxu0 0.0
  %116 = vmatprep.subr.mxu0 0.0
  %117 = vmatpush1.msra.mxu0 0.0
  %118 = vmatprep.subr.mxu0 0.0
  %119 = vmatpush1.msra.mxu0 0.0
  %120 = vmatprep.subr.mxu0 0.0
  %121 = vmatpush1.msra.mxu0 0.0
  %122 = vmatprep.subr.mxu0 0.0
  %123 = vmatpush1.msra.mxu0 0.0
  %124 = vmatprep.subr.mxu0 0.0
  %125 = vmatpush1.msra.mxu0 0.0
  %126 = vmatprep.subr.mxu0 0.0
  %127 = vmatpush1.msra.mxu0 0.0
  %128 = vmatprep.subr.mxu0 0.0
  %129 = vmatpush1.msra.mxu0 0.0
  %130 = vmatprep.subr.mxu0 0.0
  %131 = vmatpush1.msra.mxu0 0.0
  %132 = vmatprep.subr.mxu0 0.0
  %133 = vmatpush1.msra.mxu0 0.0
  %134 = vmatprep.mubr.f32.mxu0 0.0
  %135 = vmatmul.mubr.f32.gmra.mrb[0].mxu0 %v47
  %v136 = vpop.f32.mrb[0].mxu0
  %v137 = vadd.f32 %v43, %v136
  %v138 = vpop.f32.mrb[0].mxu0
  %139 = vmatprep.mubr.f32.mxu0 0.0
  %140 = vmatmul.mubr.f32.gmra.mrb[0].mxu0 %v50
  %v141 = vpop.f32.mrb[0].mxu0
  %v142 = vadd.f32 %v43, %v141
  %v143 = vpop.f32.mrb[0].mxu0
  %144 = vmatprep.mubr.f32.mxu0 0.0
  %145 = vmatmul.mubr.f32.gmra.mrb[0].mxu0 %v53
  %v146 = vpop.f32.mrb[0].mxu0
  %v147 = vadd.f32 %v43, %v146
  %v148 = vpop.f32.mrb[0].mxu0
  %149 = vmatprep.mubr.f32.mxu0 0.0
  %150 = vmatmul.mubr.f32.gmra.mrb[0].mxu0 %v56
  %v151 = vpop.f32.mrb[0].mxu0
  %v152 = vadd.f32 %v43, %v151
  %v153 = vpop.f32.mrb[0].mxu0
  %154 = vmatprep.mubr.f32.mxu0 0.0
  %155 = vmatmul.mubr.f32.gmra.mrb[0].mxu0 %v59
  %v156 = vpop.f32.mrb[0].mxu0
  %v157 = vadd.f32 %v43, %v156
  %v158 = vpop.f32.mrb[0].mxu0
  %159 = vmatprep.mubr.f32.mxu0 0.0
  %160 = vmatmul.mubr.f32.gmra.mrb[0].mxu0 %v62
  %v161 = vpop.f32.mrb[0].mxu0
  %v162 = vadd.f32 %v43, %v161
  %v163 = vpop.f32.mrb[0].mxu0
  %164 = vmatprep.mubr.f32.mxu0 0.0
  %165 = vmatmul.mubr.f32.gmra.mrb[0].mxu0 %v65
  %v166 = vpop.f32.mrb[0].mxu0
  %v167 = vadd.f32 %v43, %v166
  %v168 = vpop.f32.mrb[0].mxu0
  %169 = vmatprep.mubr.f32.mxu0 0.0
  %170 = vmatmul.mubr.f32.gmra.mrb[0].mxu0 %v68
  %v171 = vpop.f32.mrb[0].mxu0
  %v172 = vadd.f32 %v43, %v171
  %v173 = vpop.f32.mrb[0].mxu0
  %174 = vdwg.mxu0
  %v175 = vld [vmem:[%s2] sm:$0xff]
  %v176 = vld [vmem:[%s2 + $0x8] sm:$0xff]
  %v177 = vld [vmem:[%s2 + $0x10] sm:$0xff]
  %v178 = vld [vmem:[%s2 + $0x18] sm:$0xff]
  %v179 = vld [vmem:[%s4] sm:$0xff]
  %v180 = vld [vmem:[%s4 + $0x8] sm:$0xff]
  %v181 = vld [vmem:[%s4 + $0x10] sm:$0xff]
  %v182 = vld [vmem:[%s4 + $0x18] sm:$0xff]
  %v183 = vld [vmem:[%s4 + $0x20] sm:$0xff]
  %v184 = vld [vmem:[%s4 + $0x28] sm:$0xff]
  %v185 = vld [vmem:[%s4 + $0x30] sm:$0xff]
  %v186 = vld [vmem:[%s4 + $0x38] sm:$0xff]
  %v187 = vld [vmem:[%s5] sm:$0x1]
  %vm188 = vcmask 261120
  %v190 = vsel %vm188, 0.0, 0
  %192 = vmatprep.subr.mxu0 0.0
  %193 = vmatpush1.msra.mxu0 %v175
  %194 = vmatprep.subr.mxu0 0.0
  %195 = vmatpush1.msra.mxu0 %v176
  %196 = vmatprep.subr.mxu0 0.0
  %197 = vmatpush1.msra.mxu0 %v177
  %198 = vmatprep.subr.mxu0 0.0
  %199 = vmatpush1.msra.mxu0 %v178
  %200 = vmatprep.subr.mxu0 0.0
  %201 = vmatpush1.msra.mxu0 0.0
  %202 = vmatprep.subr.mxu0 0.0
  %203 = vmatpush1.msra.mxu0 0.0
  %204 = vmatprep.subr.mxu0 0.0
  %205 = vmatpush1.msra.mxu0 0.0
  %206 = vmatprep.subr.mxu0 0.0
  %207 = vmatpush1.msra.mxu0 0.0
  %208 = vmatprep.subr.mxu0 0.0
  %209 = vmatpush1.msra.mxu0 0.0
  %210 = vmatprep.subr.mxu0 0.0
  %211 = vmatpush1.msra.mxu0 0.0
  %212 = vmatprep.subr.mxu0 0.0
  %213 = vmatpush1.msra.mxu0 0.0
  %214 = vmatprep.subr.mxu0 0.0
  %215 = vmatpush1.msra.mxu0 0.0
  %216 = vmatprep.subr.mxu0 0.0
  %217 = vmatpush1.msra.mxu0 0.0
  %218 = vmatprep.subr.mxu0 0.0
  %219 = vmatpush1.msra.mxu0 0.0
  %220 = vmatprep.subr.mxu0 0.0
  %221 = vmatpush1.msra.mxu0 0.0
  %222 = vmatprep.subr.mxu0 0.0
  %223 = vmatpush1.msra.mxu0 0.0
  %224 = vmatprep.subr.mxu0 0.0
  %225 = vmatpush1.msra.mxu0 0.0
  %226 = vmatprep.subr.mxu0 0.0
  %227 = vmatpush1.msra.mxu0 0.0
  %228 = vmatprep.subr.mxu0 0.0
  %229 = vmatpush1.msra.mxu0 0.0
  %230 = vmatprep.subr.mxu0 0.0
  %231 = vmatpush1.msra.mxu0 0.0
  %232 = vmatprep.subr.mxu0 0.0
  %233 = vmatpush1.msra.mxu0 0.0
  %234 = vmatprep.subr.mxu0 0.0
  %235 = vmatpush1.msra.mxu0 0.0
  %236 = vmatprep.subr.mxu0 0.0
  %237 = vmatpush1.msra.mxu0 0.0
  %238 = vmatprep.subr.mxu0 0.0
  %239 = vmatpush1.msra.mxu0 0.0
  %240 = vmatprep.subr.mxu0 0.0
  %241 = vmatpush1.msra.mxu0 0.0
  %242 = vmatprep.subr.mxu0 0.0
  %243 = vmatpush1.msra.mxu0 0.0
  %244 = vmatprep.subr.mxu0 0.0
  %245 = vmatpush1.msra.mxu0 0.0
  %246 = vmatprep.subr.mxu0 0.0
  %247 = vmatpush1.msra.mxu0 0.0
  %248 = vmatprep.subr.mxu0 0.0
  %249 = vmatpush1.msra.mxu0 0.0
  %250 = vmatprep.subr.mxu0 0.0
  %251 = vmatpush1.msra.mxu0 0.0
  %252 = vmatprep.subr.mxu0 0.0
  %253 = vmatpush1.msra.mxu0 0.0
  %254 = vmatprep.subr.mxu0 0.0
  %255 = vmatpush1.msra.mxu0 0.0
  %256 = vmatprep.mubr.f32.mxu0 0.0
  %257 = vmatmul.mubr.f32.gmra.mrb[0].mxu0 %v190
  %v258 = vpop.f32.mrb[0].mxu0
  %v259 = vadd.f32 0.0, %v258
  %v260 = vpop.f32.mrb[0].mxu0
  %261 = vdwg.mxu0
  %v262 = vadd.f32 %v137, %v259
  %v263 = vxor.u32 %v262, 2147483648
  %v264 = vmul.f32 %v263, 1.442695
  %v265 = vpow.pop %v264
  %v266 = vadd.f32 %v265, 1.0
  %v267 = vrcp.pop %v266
  %v268 = vmul.f32 1.0, %v267
  %v269 = vmul.f32 %v268, 2.0
  %v270 = vsub.f32 %v269, 1.0
  %v271 = vmul.f32 %v268, 0.0
  %273 = vrot.lane.b32.xlu0 %v270, 64
  %v274 = vpop.permute.xlu0 %273
  %v276 = vmul.f32 %v268, %v274
  %278 = vrot.lane.b32.xlu0 %v276, 32
  %v279 = vpop.permute.xlu0 %278
  %v281 = vadd.f32 %v271, %v279
  %v282 = vtanh.pop %v281
  %284 = vrot.lane.b32.xlu0 %v282, 64
  %v285 = vpop.permute.xlu0 %284
  %v287 = vmul.f32 %v268, %v285
  %289 = vrot.lane.b32.xlu0 %v287, 32
  %v290 = vpop.permute.xlu0 %289
  %v291 = vsel %vm188, %v290, 0
  %293 = vmatprep.subr.mxu0 0.0
  %294 = vmatpush1.msra.mxu0 %v175
  %295 = vmatprep.subr.mxu0 0.0
  %296 = vmatpush1.msra.mxu0 %v176
  %297 = vmatprep.subr.mxu0 0.0
  %298 = vmatpush1.msra.mxu0 %v177
  %299 = vmatprep.subr.mxu0 0.0
  %300 = vmatpush1.msra.mxu0 %v178
  %301 = vmatprep.subr.mxu0 0.0
  %302 = vmatpush1.msra.mxu0 0.0
  %303 = vmatprep.subr.mxu0 0.0
  %304 = vmatpush1.msra.mxu0 0.0
  %305 = vmatprep.subr.mxu0 0.0
  %306 = vmatpush1.msra.mxu0 0.0
  %307 = vmatprep.subr.mxu0 0.0
  %308 = vmatpush1.msra.mxu0 0.0
  %309 = vmatprep.subr.mxu0 0.0
  %310 = vmatpush1.msra.mxu0 0.0
  %311 = vmatprep.subr.mxu0 0.0
  %312 = vmatpush1.msra.mxu0 0.0
  %313 = vmatprep.subr.mxu0 0.0
  %314 = vmatpush1.msra.mxu0 0.0
  %315 = vmatprep.subr.mxu0 0.0
  %316 = vmatpush1.msra.mxu0 0.0
  %317 = vmatprep.subr.mxu0 0.0
  %318 = vmatpush1.msra.mxu0 0.0
  %319 = vmatprep.subr.mxu0 0.0
  %320 = vmatpush1.msra.mxu0 0.0
  %321 = vmatprep.subr.mxu0 0.0
  %322 = vmatpush1.msra.mxu0 0.0
  %323 = vmatprep.subr.mxu0 0.0
  %324 = vmatpush1.msra.mxu0 0.0
  %325 = vmatprep.subr.mxu0 0.0
  %326 = vmatpush1.msra.mxu0 0.0
  %327 = vmatprep.subr.mxu0 0.0
  %328 = vmatpush1.msra.mxu0 0.0
  %329 = vmatprep.subr.mxu0 0.0
  %330 = vmatpush1.msra.mxu0 0.0
  %331 = vmatprep.subr.mxu0 0.0
  %332 = vmatpush1.msra.mxu0 0.0
  %333 = vmatprep.subr.mxu0 0.0
  %334 = vmatpush1.msra.mxu0 0.0
  %335 = vmatprep.subr.mxu0 0.0
  %336 = vmatpush1.msra.mxu0 0.0
  %337 = vmatprep.subr.mxu0 0.0
  %338 = vmatpush1.msra.mxu0 0.0
  %339 = vmatprep.subr.mxu0 0.0
  %340 = vmatpush1.msra.mxu0 0.0
  %341 = vmatprep.subr.mxu0 0.0
  %342 = vmatpush1.msra.mxu0 0.0
  %343 = vmatprep.subr.mxu0 0.0
  %344 = vmatpush1.msra.mxu0 0.0
  %345 = vmatprep.subr.mxu0 0.0
  %346 = vmatpush1.msra.mxu0 0.0
  %347 = vmatprep.subr.mxu0 0.0
  %348 = vmatpush1.msra.mxu0 0.0
  %349 = vmatprep.subr.mxu0 0.0
  %350 = vmatpush1.msra.mxu0 0.0
  %351 = vmatprep.subr.mxu0 0.0
  %352 = vmatpush1.msra.mxu0 0.0
  %353 = vmatprep.subr.mxu0 0.0
  %354 = vmatpush1.msra.mxu0 0.0
  %355 = vmatprep.subr.mxu0 0.0
  %356 = vmatpush1.msra.mxu0 0.0
  %357 = vmatprep.mubr.f32.mxu0 0.0
  %358 = vmatmul.mubr.f32.gmra.mrb[0].mxu0 %v291
  %v359 = vpop.f32.mrb[0].mxu0
  %v360 = vadd.f32 0.0, %v359
  %v361 = vpop.f32.mrb[0].mxu0
  %362 = vdwg.mxu0
  %v363 = vadd.f32 %v142, %v360
  %v364 = vxor.u32 %v363, 2147483648
  %v365 = vmul.f32 %v364, 1.442695
  %v366 = vpow.pop %v365
  %v367 = vadd.f32 %v366, 1.0
  %v368 = vrcp.pop %v367
  %v369 = vmul.f32 1.0, %v368
  %v370 = vmul.f32 %v369, 2.0
  %v371 = vsub.f32 %v370, 1.0
  %v372 = vmul.f32 %v369, %v281
  %374 = vrot.lane.b32.xlu0 %v371, 64
  %v375 = vpop.permute.xlu0 %374
  %v377 = vmul.f32 %v369, %v375
  %379 = vrot.lane.b32.xlu0 %v377, 32
  %v380 = vpop.permute.xlu0 %379
  %v382 = vadd.f32 %v372, %v380
  %v383 = vtanh.pop %v382
  %385 = vrot.lane.b32.xlu0 %v383, 64
  %v386 = vpop.permute.xlu0 %385
  %v388 = vmul.f32 %v369, %v386
  %389 = vrot.lane.b32.xlu0 %v287, 64
  %v390 = vpop.permute.xlu0 %389
  %v392 = vsel %vm188, 0.0, %v390
  %v394 = vlaneseq
  %v395 = vshrl.u32 %v394, 7
  %v396 = vsub.s32 0, %v395
  %v397 = vrot.slane %v187, %v396
  %vm399 = vcmask 523264
  %v401 = vsel %vm399, %v392, 0
  %403 = vmatprep.subr.mxu0 0.0
  %404 = vmatpush1.msra.mxu0 %v179
  %405 = vmatprep.subr.mxu0 0.0
  %406 = vmatpush1.msra.mxu0 %v180
  %407 = vmatprep.subr.mxu0 0.0
  %408 = vmatpush1.msra.mxu0 %v181
  %409 = vmatprep.subr.mxu0 0.0
  %410 = vmatpush1.msra.mxu0 %v182
  %411 = vmatprep.subr.mxu0 0.0
  %412 = vmatpush1.msra.mxu0 %v183
  %413 = vmatprep.subr.mxu0 0.0
  %414 = vmatpush1.msra.mxu0 %v184
  %415 = vmatprep.subr.mxu0 0.0
  %416 = vmatpush1.msra.mxu0 %v185
  %417 = vmatprep.subr.mxu0 0.0
  %418 = vmatpush1.msra.mxu0 %v186
  %419 = vmatprep.subr.mxu0 0.0
  %420 = vmatpush1.msra.mxu0 0.0
  %421 = vmatprep.subr.mxu0 0.0
  %422 = vmatpush1.msra.mxu0 0.0
  %423 = vmatprep.subr.mxu0 0.0
  %424 = vmatpush1.msra.mxu0 0.0
  %425 = vmatprep.subr.mxu0 0.0
  %426 = vmatpush1.msra.mxu0 0.0
  %427 = vmatprep.subr.mxu0 0.0
  %428 = vmatpush1.msra.mxu0 0.0
  %429 = vmatprep.subr.mxu0 0.0
  %430 = vmatpush1.msra.mxu0 0.0
  %431 = vmatprep.subr.mxu0 0.0
  %432 = vmatpush1.msra.mxu0 0.0
  %433 = vmatprep.subr.mxu0 0.0
  %434 = vmatpush1.msra.mxu0 0.0
  %435 = vmatprep.subr.mxu0 0.0
  %436 = vmatpush1.msra.mxu0 0.0
  %437 = vmatprep.subr.mxu0 0.0
  %438 = vmatpush1.msra.mxu0 0.0
  %439 = vmatprep.subr.mxu0 0.0
  %440 = vmatpush1.msra.mxu0 0.0
  %441 = vmatprep.subr.mxu0 0.0
  %442 = vmatpush1.msra.mxu0 0.0
  %443 = vmatprep.subr.mxu0 0.0
  %444 = vmatpush1.msra.mxu0 0.0
  %445 = vmatprep.subr.mxu0 0.0
  %446 = vmatpush1.msra.mxu0 0.0
  %447 = vmatprep.subr.mxu0 0.0
  %448 = vmatpush1.msra.mxu0 0.0
  %449 = vmatprep.subr.mxu0 0.0
  %450 = vmatpush1.msra.mxu0 0.0
  %451 = vmatprep.subr.mxu0 0.0
  %452 = vmatpush1.msra.mxu0 0.0
  %453 = vmatprep.subr.mxu0 0.0
  %454 = vmatpush1.msra.mxu0 0.0
  %455 = vmatprep.subr.mxu0 0.0
  %456 = vmatpush1.msra.mxu0 0.0
  %457 = vmatprep.subr.mxu0 0.0
  %458 = vmatpush1.msra.mxu0 0.0
  %459 = vmatprep.subr.mxu0 0.0
  %460 = vmatpush1.msra.mxu0 0.0
  %461 = vmatprep.subr.mxu0 0.0
  %462 = vmatpush1.msra.mxu0 0.0
  %463 = vmatprep.subr.mxu0 0.0
  %464 = vmatpush1.msra.mxu0 0.0
  %465 = vmatprep.subr.mxu0 0.0
  %466 = vmatpush1.msra.mxu0 0.0
  %467 = vmatprep.mubr.f32.mxu0 0.0
  %468 = vmatmul.mubr.f32.gmra.mrb[0].mxu0 %v401
  %v469 = vpop.f32.mrb[0].mxu0
  %v470 = vadd.f32 %v397, %v469
  %v471 = vpop.f32.mrb[0].mxu0
  %472 = vdwg.mxu0
  %v473 = vxor.u32 %v470, 2147483648
  %v474 = vmul.f32 %v473, 1.442695
  %v475 = vpow.pop %v474
  %v476 = vadd.f32 %v475, 1.0
  %v477 = vrcp.pop %v476
  %v478 = vmul.f32 1.0, %v477
  %v479 = vmul.f32 %v478, 2.0
  %v480 = vsub.f32 %v479, 1.0
  %v481 = vmul.f32 %v478, 0.0
  %483 = vrot.lane.b32.xlu0 %v480, 64
  %v484 = vpop.permute.xlu0 %483
  %v486 = vmul.f32 %v478, %v484
  %488 = vrot.lane.b32.xlu0 %v486, 32
  %v489 = vpop.permute.xlu0 %488
  %v491 = vadd.f32 %v481, %v489
  %v492 = vtanh.pop %v491
  %494 = vrot.lane.b32.xlu0 %v492, 64
  %v495 = vpop.permute.xlu0 %494
  %v497 = vmul.f32 %v478, %v495
  %499 = vrot.lane.b32.xlu0 %v388, 32
  %v500 = vpop.permute.xlu0 %499
  %v501 = vsel %vm188, %v500, 0
  %503 = vmatprep.subr.mxu0 0.0
  %504 = vmatpush1.msra.mxu0 %v175
  %505 = vmatprep.subr.mxu0 0.0
  %506 = vmatpush1.msra.mxu0 %v176
  %507 = vmatprep.subr.mxu0 0.0
  %508 = vmatpush1.msra.mxu0 %v177
  %509 = vmatprep.subr.mxu0 0.0
  %510 = vmatpush1.msra.mxu0 %v178
  %511 = vmatprep.subr.mxu0 0.0
  %512 = vmatpush1.msra.mxu0 0.0
  %513 = vmatprep.subr.mxu0 0.0
  %514 = vmatpush1.msra.mxu0 0.0
  %515 = vmatprep.subr.mxu0 0.0
  %516 = vmatpush1.msra.mxu0 0.0
  %517 = vmatprep.subr.mxu0 0.0
  %518 = vmatpush1.msra.mxu0 0.0
  %519 = vmatprep.subr.mxu0 0.0
  %520 = vmatpush1.msra.mxu0 0.0
  %521 = vmatprep.subr.mxu0 0.0
  %522 = vmatpush1.msra.mxu0 0.0
  %523 = vmatprep.subr.mxu0 0.0
  %524 = vmatpush1.msra.mxu0 0.0
  %525 = vmatprep.subr.mxu0 0.0
  %526 = vmatpush1.msra.mxu0 0.0
  %527 = vmatprep.subr.mxu0 0.0
  %528 = vmatpush1.msra.mxu0 0.0
  %529 = vmatprep.subr.mxu0 0.0
  %530 = vmatpush1.msra.mxu0 0.0
  %531 = vmatprep.subr.mxu0 0.0
  %532 = vmatpush1.msra.mxu0 0.0
  %533 = vmatprep.subr.mxu0 0.0
  %534 = vmatpush1.msra.mxu0 0.0
  %535 = vmatprep.subr.mxu0 0.0
  %536 = vmatpush1.msra.mxu0 0.0
  %537 = vmatprep.subr.mxu0 0.0
  %538 = vmatpush1.msra.mxu0 0.0
  %539 = vmatprep.subr.mxu0 0.0
  %540 = vmatpush1.msra.mxu0 0.0
  %541 = vmatprep.subr.mxu0 0.0
  %542 = vmatpush1.msra.mxu0 0.0
  %543 = vmatprep.subr.mxu0 0.0
  %544 = vmatpush1.msra.mxu0 0.0
  %545 = vmatprep.subr.mxu0 0.0
  %546 = vmatpush1.msra.mxu0 0.0
  %547 = vmatprep.subr.mxu0 0.0
  %548 = vmatpush1.msra.mxu0 0.0
  %549 = vmatprep.subr.mxu0 0.0
  %550 = vmatpush1.msra.mxu0 0.0
  %551 = vmatprep.subr.mxu0 0.0
  %552 = vmatpush1.msra.mxu0 0.0
  %553 = vmatprep.subr.mxu0 0.0
  %554 = vmatpush1.msra.mxu0 0.0
  %555 = vmatprep.subr.mxu0 0.0
  %556 = vmatpush1.msra.mxu0 0.0
  %557 = vmatprep.subr.mxu0 0.0
  %558 = vmatpush1.msra.mxu0 0.0
  %559 = vmatprep.subr.mxu0 0.0
  %560 = vmatpush1.msra.mxu0 0.0
  %561 = vmatprep.subr.mxu0 0.0
  %562 = vmatpush1.msra.mxu0 0.0
  %563 = vmatprep.subr.mxu0 0.0
  %564 = vmatpush1.msra.mxu0 0.0
  %565 = vmatprep.subr.mxu0 0.0
  %566 = vmatpush1.msra.mxu0 0.0
  %567 = vmatprep.mubr.f32.mxu0 0.0
  %568 = vmatmul.mubr.f32.gmra.mrb[0].mxu0 %v501
  %v569 = vpop.f32.mrb[0].mxu0
  %v570 = vadd.f32 0.0, %v569
  %v571 = vpop.f32.mrb[0].mxu0
  %572 = vdwg.mxu0
  %v573 = vadd.f32 %v147, %v570
  %v574 = vxor.u32 %v573, 2147483648
  %v575 = vmul.f32 %v574, 1.442695
  %v576 = vpow.pop %v575
  %v577 = vadd.f32 %v576, 1.0
  %v578 = vrcp.pop %v577
  %v579 = vmul.f32 1.0, %v578
  %v580 = vmul.f32 %v579, 2.0
  %v581 = vsub.f32 %v580, 1.0
  %v582 = vmul.f32 %v579, %v382
  %584 = vrot.lane.b32.xlu0 %v581, 64
  %v585 = vpop.permute.xlu0 %584
  %v587 = vmul.f32 %v579, %v585
  %589 = vrot.lane.b32.xlu0 %v587, 32
  %v590 = vpop.permute.xlu0 %589
  %v592 = vadd.f32 %v582, %v590
  %v593 = vtanh.pop %v592
  %595 = vrot.lane.b32.xlu0 %v593, 64
  %v596 = vpop.permute.xlu0 %595
  %v598 = vmul.f32 %v579, %v596
  %600 = vrot.lane.b32.xlu0 %v497, 32
  %v601 = vpop.permute.xlu0 %600
  %603 = vrot.lane.b32.xlu0 %v388, 64
  %v604 = vpop.permute.xlu0 %603
  %v606 = vsel %vm188, %v601, %v604
  %v608 = vsel %vm399, %v606, 0
  %610 = vmatprep.subr.mxu0 0.0
  %611 = vmatpush1.msra.mxu0 %v179
  %612 = vmatprep.subr.mxu0 0.0
  %613 = vmatpush1.msra.mxu0 %v180
  %614 = vmatprep.subr.mxu0 0.0
  %615 = vmatpush1.msra.mxu0 %v181
  %616 = vmatprep.subr.mxu0 0.0
  %617 = vmatpush1.msra.mxu0 %v182
  %618 = vmatprep.subr.mxu0 0.0
  %619 = vmatpush1.msra.mxu0 %v183
  %620 = vmatprep.subr.mxu0 0.0
  %621 = vmatpush1.msra.mxu0 %v184
  %622 = vmatprep.subr.mxu0 0.0
  %623 = vmatpush1.msra.mxu0 %v185
  %624 = vmatprep.subr.mxu0 0.0
  %625 = vmatpush1.msra.mxu0 %v186
  %626 = vmatprep.subr.mxu0 0.0
  %627 = vmatpush1.msra.mxu0 0.0
  %628 = vmatprep.subr.mxu0 0.0
  %629 = vmatpush1.msra.mxu0 0.0
  %630 = vmatprep.subr.mxu0 0.0
  %631 = vmatpush1.msra.mxu0 0.0
  %632 = vmatprep.subr.mxu0 0.0
  %633 = vmatpush1.msra.mxu0 0.0
  %634 = vmatprep.subr.mxu0 0.0
  %635 = vmatpush1.msra.mxu0 0.0
  %636 = vmatprep.subr.mxu0 0.0
  %637 = vmatpush1.msra.mxu0 0.0
  %638 = vmatprep.subr.mxu0 0.0
  %639 = vmatpush1.msra.mxu0 0.0
  %640 = vmatprep.subr.mxu0 0.0
  %641 = vmatpush1.msra.mxu0 0.0
  %642 = vmatprep.subr.mxu0 0.0
  %643 = vmatpush1.msra.mxu0 0.0
  %644 = vmatprep.subr.mxu0 0.0
  %645 = vmatpush1.msra.mxu0 0.0
  %646 = vmatprep.subr.mxu0 0.0
  %647 = vmatpush1.msra.mxu0 0.0
  %648 = vmatprep.subr.mxu0 0.0
  %649 = vmatpush1.msra.mxu0 0.0
  %650 = vmatprep.subr.mxu0 0.0
  %651 = vmatpush1.msra.mxu0 0.0
  %652 = vmatprep.subr.mxu0 0.0
  %653 = vmatpush1.msra.mxu0 0.0
  %654 = vmatprep.subr.mxu0 0.0
  %655 = vmatpush1.msra.mxu0 0.0
  %656 = vmatprep.subr.mxu0 0.0
  %657 = vmatpush1.msra.mxu0 0.0
  %658 = vmatprep.subr.mxu0 0.0
  %659 = vmatpush1.msra.mxu0 0.0
  %660 = vmatprep.subr.mxu0 0.0
  %661 = vmatpush1.msra.mxu0 0.0
  %662 = vmatprep.subr.mxu0 0.0
  %663 = vmatpush1.msra.mxu0 0.0
  %664 = vmatprep.subr.mxu0 0.0
  %665 = vmatpush1.msra.mxu0 0.0
  %666 = vmatprep.subr.mxu0 0.0
  %667 = vmatpush1.msra.mxu0 0.0
  %668 = vmatprep.subr.mxu0 0.0
  %669 = vmatpush1.msra.mxu0 0.0
  %670 = vmatprep.subr.mxu0 0.0
  %671 = vmatpush1.msra.mxu0 0.0
  %672 = vmatprep.subr.mxu0 0.0
  %673 = vmatpush1.msra.mxu0 0.0
  %674 = vmatprep.mubr.f32.mxu0 0.0
  %675 = vmatmul.mubr.f32.gmra.mrb[0].mxu0 %v608
  %v676 = vpop.f32.mrb[0].mxu0
  %v677 = vadd.f32 %v397, %v676
  %v678 = vpop.f32.mrb[0].mxu0
  %679 = vdwg.mxu0
  %v680 = vxor.u32 %v677, 2147483648
  %v681 = vmul.f32 %v680, 1.442695
  %v682 = vpow.pop %v681
  %v683 = vadd.f32 %v682, 1.0
  %v684 = vrcp.pop %v683
  %v685 = vmul.f32 1.0, %v684
  %v686 = vmul.f32 %v685, 2.0
  %v687 = vsub.f32 %v686, 1.0
  %v688 = vmul.f32 %v685, %v491
  %690 = vrot.lane.b32.xlu0 %v687, 64
  %v691 = vpop.permute.xlu0 %690
  %v693 = vmul.f32 %v685, %v691
  %695 = vrot.lane.b32.xlu0 %v693, 32
  %v696 = vpop.permute.xlu0 %695
  %v698 = vadd.f32 %v688, %v696
  %v699 = vtanh.pop %v698
  %701 = vrot.lane.b32.xlu0 %v699, 64
  %v702 = vpop.permute.xlu0 %701
  %v704 = vmul.f32 %v685, %v702
  %706 = vrot.lane.b32.xlu0 %v598, 32
  %v707 = vpop.permute.xlu0 %706
  %v708 = vsel %vm188, %v707, 0
  %710 = vmatprep.subr.mxu0 0.0
  %711 = vmatpush1.msra.mxu0 %v175
  %712 = vmatprep.subr.mxu0 0.0
  %713 = vmatpush1.msra.mxu0 %v176
  %714 = vmatprep.subr.mxu0 0.0
  %715 = vmatpush1.msra.mxu0 %v177
  %716 = vmatprep.subr.mxu0 0.0
  %717 = vmatpush1.msra.mxu0 %v178
  %718 = vmatprep.subr.mxu0 0.0
  %719 = vmatpush1.msra.mxu0 0.0
  %720 = vmatprep.subr.mxu0 0.0
  %721 = vmatpush1.msra.mxu0 0.0
  %722 = vmatprep.subr.mxu0 0.0
  %723 = vmatpush1.msra.mxu0 0.0
  %724 = vmatprep.subr.mxu0 0.0
  %725 = vmatpush1.msra.mxu0 0.0
  %726 = vmatprep.subr.mxu0 0.0
  %727 = vmatpush1.msra.mxu0 0.0
  %728 = vmatprep.subr.mxu0 0.0
  %729 = vmatpush1.msra.mxu0 0.0
  %730 = vmatprep.subr.mxu0 0.0
  %731 = vmatpush1.msra.mxu0 0.0
  %732 = vmatprep.subr.mxu0 0.0
  %733 = vmatpush1.msra.mxu0 0.0
  %734 = vmatprep.subr.mxu0 0.0
  %735 = vmatpush1.msra.mxu0 0.0
  %736 = vmatprep.subr.mxu0 0.0
  %737 = vmatpush1.msra.mxu0 0.0
  %738 = vmatprep.subr.mxu0 0.0
  %739 = vmatpush1.msra.mxu0 0.0
  %740 = vmatprep.subr.mxu0 0.0
  %741 = vmatpush1.msra.mxu0 0.0
  %742 = vmatprep.subr.mxu0 0.0
  %743 = vmatpush1.msra.mxu0 0.0
  %744 = vmatprep.subr.mxu0 0.0
  %745 = vmatpush1.msra.mxu0 0.0
  %746 = vmatprep.subr.mxu0 0.0
  %747 = vmatpush1.msra.mxu0 0.0
  %748 = vmatprep.subr.mxu0 0.0
  %749 = vmatpush1.msra.mxu0 0.0
  %750 = vmatprep.subr.mxu0 0.0
  %751 = vmatpush1.msra.mxu0 0.0
  %752 = vmatprep.subr.mxu0 0.0
  %753 = vmatpush1.msra.mxu0 0.0
  %754 = vmatprep.subr.mxu0 0.0
  %755 = vmatpush1.msra.mxu0 0.0
  %756 = vmatprep.subr.mxu0 0.0
  %757 = vmatpush1.msra.mxu0 0.0
  %758 = vmatprep.subr.mxu0 0.0
  %759 = vmatpush1.msra.mxu0 0.0
  %760 = vmatprep.subr.mxu0 0.0
  %761 = vmatpush1.msra.mxu0 0.0
  %762 = vmatprep.subr.mxu0 0.0
  %763 = vmatpush1.msra.mxu0 0.0
  %764 = vmatprep.subr.mxu0 0.0
  %765 = vmatpush1.msra.mxu0 0.0
  %766 = vmatprep.subr.mxu0 0.0
  %767 = vmatpush1.msra.mxu0 0.0
  %768 = vmatprep.subr.mxu0 0.0
  %769 = vmatpush1.msra.mxu0 0.0
  %770 = vmatprep.subr.mxu0 0.0
  %771 = vmatpush1.msra.mxu0 0.0
  %772 = vmatprep.subr.mxu0 0.0
  %773 = vmatpush1.msra.mxu0 0.0
  %774 = vmatprep.mubr.f32.mxu0 0.0
  %775 = vmatmul.mubr.f32.gmra.mrb[0].mxu0 %v708
  %v776 = vpop.f32.mrb[0].mxu0
  %v777 = vadd.f32 0.0, %v776
  %v778 = vpop.f32.mrb[0].mxu0
  %779 = vdwg.mxu0
  %v780 = vadd.f32 %v152, %v777
  %v781 = vxor.u32 %v780, 2147483648
  %v782 = vmul.f32 %v781, 1.442695
  %v783 = vpow.pop %v782
  %v784 = vadd.f32 %v783, 1.0
  %v785 = vrcp.pop %v784
  %v786 = vmul.f32 1.0, %v785
  %v787 = vmul.f32 %v786, 2.0
  %v788 = vsub.f32 %v787, 1.0
  %v789 = vmul.f32 %v786, %v592
  %791 = vrot.lane.b32.xlu0 %v788, 64
  %v792 = vpop.permute.xlu0 %791
  %v794 = vmul.f32 %v786, %v792
  %796 = vrot.lane.b32.xlu0 %v794, 32
  %v797 = vpop.permute.xlu0 %796
  %v799 = vadd.f32 %v789, %v797
  %v800 = vtanh.pop %v799
  %802 = vrot.lane.b32.xlu0 %v800, 64
  %v803 = vpop.permute.xlu0 %802
  %v805 = vmul.f32 %v786, %v803
  %807 = vrot.lane.b32.xlu0 %v704, 32
  %v808 = vpop.permute.xlu0 %807
  %810 = vrot.lane.b32.xlu0 %v598, 64
  %v811 = vpop.permute.xlu0 %810
  %v813 = vsel %vm188, %v808, %v811
  %v815 = vsel %vm399, %v813, 0
  %817 = vmatprep.subr.mxu0 0.0
  %818 = vmatpush1.msra.mxu0 %v179
  %819 = vmatprep.subr.mxu0 0.0
  %820 = vmatpush1.msra.mxu0 %v180
  %821 = vmatprep.subr.mxu0 0.0
  %822 = vmatpush1.msra.mxu0 %v181
  %823 = vmatprep.subr.mxu0 0.0
  %824 = vmatpush1.msra.mxu0 %v182
  %825 = vmatprep.subr.mxu0 0.0
  %826 = vmatpush1.msra.mxu0 %v183
  %827 = vmatprep.subr.mxu0 0.0
  %828 = vmatpush1.msra.mxu0 %v184
  %829 = vmatprep.subr.mxu0 0.0
  %830 = vmatpush1.msra.mxu0 %v185
  %831 = vmatprep.subr.mxu0 0.0
  %832 = vmatpush1.msra.mxu0 %v186
  %833 = vmatprep.subr.mxu0 0.0
  %834 = vmatpush1.msra.mxu0 0.0
  %835 = vmatprep.subr.mxu0 0.0
  %836 = vmatpush1.msra.mxu0 0.0
  %837 = vmatprep.subr.mxu0 0.0
  %838 = vmatpush1.msra.mxu0 0.0
  %839 = vmatprep.subr.mxu0 0.0
  %840 = vmatpush1.msra.mxu0 0.0
  %841 = vmatprep.subr.mxu0 0.0
  %842 = vmatpush1.msra.mxu0 0.0
  %843 = vmatprep.subr.mxu0 0.0
  %844 = vmatpush1.msra.mxu0 0.0
  %845 = vmatprep.subr.mxu0 0.0
  %846 = vmatpush1.msra.mxu0 0.0
  %847 = vmatprep.subr.mxu0 0.0
  %848 = vmatpush1.msra.mxu0 0.0
  %849 = vmatprep.subr.mxu0 0.0
  %850 = vmatpush1.msra.mxu0 0.0
  %851 = vmatprep.subr.mxu0 0.0
  %852 = vmatpush1.msra.mxu0 0.0
  %853 = vmatprep.subr.mxu0 0.0
  %854 = vmatpush1.msra.mxu0 0.0
  %855 = vmatprep.subr.mxu0 0.0
  %856 = vmatpush1.msra.mxu0 0.0
  %857 = vmatprep.subr.mxu0 0.0
  %858 = vmatpush1.msra.mxu0 0.0
  %859 = vmatprep.subr.mxu0 0.0
  %860 = vmatpush1.msra.mxu0 0.0
  %861 = vmatprep.subr.mxu0 0.0
  %862 = vmatpush1.msra.mxu0 0.0
  %863 = vmatprep.subr.mxu0 0.0
  %864 = vmatpush1.msra.mxu0 0.0
  %865 = vmatprep.subr.mxu0 0.0
  %866 = vmatpush1.msra.mxu0 0.0
  %867 = vmatprep.subr.mxu0 0.0
  %868 = vmatpush1.msra.mxu0 0.0
  %869 = vmatprep.subr.mxu0 0.0
  %870 = vmatpush1.msra.mxu0 0.0
  %871 = vmatprep.subr.mxu0 0.0
  %872 = vmatpush1.msra.mxu0 0.0
  %873 = vmatprep.subr.mxu0 0.0
  %874 = vmatpush1.msra.mxu0 0.0
  %875 = vmatprep.subr.mxu0 0.0
  %876 = vmatpush1.msra.mxu0 0.0
  %877 = vmatprep.subr.mxu0 0.0
  %878 = vmatpush1.msra.mxu0 0.0
  %879 = vmatprep.subr.mxu0 0.0
  %880 = vmatpush1.msra.mxu0 0.0
  %881 = vmatprep.mubr.f32.mxu0 0.0
  %882 = vmatmul.mubr.f32.gmra.mrb[0].mxu0 %v815
  %v883 = vpop.f32.mrb[0].mxu0
  %v884 = vadd.f32 %v397, %v883
  %v885 = vpop.f32.mrb[0].mxu0
  %886 = vdwg.mxu0
  %v887 = vxor.u32 %v884, 2147483648
  %v888 = vmul.f32 %v887, 1.442695
  %v889 = vpow.pop %v888
  %v890 = vadd.f32 %v889, 1.0
  %v891 = vrcp.pop %v890
  %v892 = vmul.f32 1.0, %v891
  %v893 = vmul.f32 %v892, 2.0
  %v894 = vsub.f32 %v893, 1.0
  %v895 = vmul.f32 %v892, %v698
  %897 = vrot.lane.b32.xlu0 %v894, 64
  %v898 = vpop.permute.xlu0 %897
  %v900 = vmul.f32 %v892, %v898
  %902 = vrot.lane.b32.xlu0 %v900, 32
  %v903 = vpop.permute.xlu0 %902
  %v905 = vadd.f32 %v895, %v903
  %v906 = vtanh.pop %v905
  %908 = vrot.lane.b32.xlu0 %v906, 64
  %v909 = vpop.permute.xlu0 %908
  %v911 = vmul.f32 %v892, %v909
  %913 = vrot.lane.b32.xlu0 %v805, 32
  %v914 = vpop.permute.xlu0 %913
  %v915 = vsel %vm188, %v914, 0
  %917 = vmatprep.subr.mxu0 0.0
  %918 = vmatpush1.msra.mxu0 %v175
  %919 = vmatprep.subr.mxu0 0.0
  %920 = vmatpush1.msra.mxu0 %v176
  %921 = vmatprep.subr.mxu0 0.0
  %922 = vmatpush1.msra.mxu0 %v177
  %923 = vmatprep.subr.mxu0 0.0
  %924 = vmatpush1.msra.mxu0 %v178
  %925 = vmatprep.subr.mxu0 0.0
  %926 = vmatpush1.msra.mxu0 0.0
  %927 = vmatprep.subr.mxu0 0.0
  %928 = vmatpush1.msra.mxu0 0.0
  %929 = vmatprep.subr.mxu0 0.0
  %930 = vmatpush1.msra.mxu0 0.0
  %931 = vmatprep.subr.mxu0 0.0
  %932 = vmatpush1.msra.mxu0 0.0
  %933 = vmatprep.subr.mxu0 0.0
  %934 = vmatpush1.msra.mxu0 0.0
  %935 = vmatprep.subr.mxu0 0.0
  %936 = vmatpush1.msra.mxu0 0.0
  %937 = vmatprep.subr.mxu0 0.0
  %938 = vmatpush1.msra.mxu0 0.0
  %939 = vmatprep.subr.mxu0 0.0
  %940 = vmatpush1.msra.mxu0 0.0
  %941 = vmatprep.subr.mxu0 0.0
  %942 = vmatpush1.msra.mxu0 0.0
  %943 = vmatprep.subr.mxu0 0.0
  %944 = vmatpush1.msra.mxu0 0.0
  %945 = vmatprep.subr.mxu0 0.0
  %946 = vmatpush1.msra.mxu0 0.0
  %947 = vmatprep.subr.mxu0 0.0
  %948 = vmatpush1.msra.mxu0 0.0
  %949 = vmatprep.subr.mxu0 0.0
  %950 = vmatpush1.msra.mxu0 0.0
  %951 = vmatprep.subr.mxu0 0.0
  %952 = vmatpush1.msra.mxu0 0.0
  %953 = vmatprep.subr.mxu0 0.0
  %954 = vmatpush1.msra.mxu0 0.0
  %955 = vmatprep.subr.mxu0 0.0
  %956 = vmatpush1.msra.mxu0 0.0
  %957 = vmatprep.subr.mxu0 0.0
  %958 = vmatpush1.msra.mxu0 0.0
  %959 = vmatprep.subr.mxu0 0.0
  %960 = vmatpush1.msra.mxu0 0.0
  %961 = vmatprep.subr.mxu0 0.0
  %962 = vmatpush1.msra.mxu0 0.0
  %963 = vmatprep.subr.mxu0 0.0
  %964 = vmatpush1.msra.mxu0 0.0
  %965 = vmatprep.subr.mxu0 0.0
  %966 = vmatpush1.msra.mxu0 0.0
  %967 = vmatprep.subr.mxu0 0.0
  %968 = vmatpush1.msra.mxu0 0.0
  %969 = vmatprep.subr.mxu0 0.0
  %970 = vmatpush1.msra.mxu0 0.0
  %971 = vmatprep.subr.mxu0 0.0
  %972 = vmatpush1.msra.mxu0 0.0
  %973 = vmatprep.subr.mxu0 0.0
  %974 = vmatpush1.msra.mxu0 0.0
  %975 = vmatprep.subr.mxu0 0.0
  %976 = vmatpush1.msra.mxu0 0.0
  %977 = vmatprep.subr.mxu0 0.0
  %978 = vmatpush1.msra.mxu0 0.0
  %979 = vmatprep.subr.mxu0 0.0
  %980 = vmatpush1.msra.mxu0 0.0
  %981 = vmatprep.mubr.f32.mxu0 0.0
  %982 = vmatmul.mubr.f32.gmra.mrb[0].mxu0 %v915
  %v983 = vpop.f32.mrb[0].mxu0
  %v984 = vadd.f32 0.0, %v983
  %v985 = vpop.f32.mrb[0].mxu0
  %986 = vdwg.mxu0
  %v987 = vadd.f32 %v157, %v984
  %v988 = vxor.u32 %v987, 2147483648
  %v989 = vmul.f32 %v988, 1.442695
  %v990 = vpow.pop %v989
  %v991 = vadd.f32 %v990, 1.0
  %v992 = vrcp.pop %v991
  %v993 = vmul.f32 1.0, %v992
  %v994 = vmul.f32 %v993, 2.0
  %v995 = vsub.f32 %v994, 1.0
  %v996 = vmul.f32 %v993, %v799
  %998 = vrot.lane.b32.xlu0 %v995, 64
  %v999 = vpop.permute.xlu0 %998
  %v1001 = vmul.f32 %v993, %v999
  %1003 = vrot.lane.b32.xlu0 %v1001, 32
  %v1004 = vpop.permute.xlu0 %1003
  %v1006 = vadd.f32 %v996, %v1004
  %v1007 = vtanh.pop %v1006
  %1009 = vrot.lane.b32.xlu0 %v1007, 64
  %v1010 = vpop.permute.xlu0 %1009
  %v1012 = vmul.f32 %v993, %v1010
  %1014 = vrot.lane.b32.xlu0 %v911, 32
  %v1015 = vpop.permute.xlu0 %1014
  %1017 = vrot.lane.b32.xlu0 %v805, 64
  %v1018 = vpop.permute.xlu0 %1017
  %v1020 = vsel %vm188, %v1015, %v1018
  %v1022 = vsel %vm399, %v1020, 0
  %1024 = vmatprep.subr.mxu0 0.0
  %1025 = vmatpush1.msra.mxu0 %v179
  %1026 = vmatprep.subr.mxu0 0.0
  %1027 = vmatpush1.msra.mxu0 %v180
  %1028 = vmatprep.subr.mxu0 0.0
  %1029 = vmatpush1.msra.mxu0 %v181
  %1030 = vmatprep.subr.mxu0 0.0
  %1031 = vmatpush1.msra.mxu0 %v182
  %1032 = vmatprep.subr.mxu0 0.0
  %1033 = vmatpush1.msra.mxu0 %v183
  %1034 = vmatprep.subr.mxu0 0.0
  %1035 = vmatpush1.msra.mxu0 %v184
  %1036 = vmatprep.subr.mxu0 0.0
  %1037 = vmatpush1.msra.mxu0 %v185
  %1038 = vmatprep.subr.mxu0 0.0
  %1039 = vmatpush1.msra.mxu0 %v186
  %1040 = vmatprep.subr.mxu0 0.0
  %1041 = vmatpush1.msra.mxu0 0.0
  %1042 = vmatprep.subr.mxu0 0.0
  %1043 = vmatpush1.msra.mxu0 0.0
  %1044 = vmatprep.subr.mxu0 0.0
  %1045 = vmatpush1.msra.mxu0 0.0
  %1046 = vmatprep.subr.mxu0 0.0
  %1047 = vmatpush1.msra.mxu0 0.0
  %1048 = vmatprep.subr.mxu0 0.0
  %1049 = vmatpush1.msra.mxu0 0.0
  %1050 = vmatprep.subr.mxu0 0.0
  %1051 = vmatpush1.msra.mxu0 0.0
  %1052 = vmatprep.subr.mxu0 0.0
  %1053 = vmatpush1.msra.mxu0 0.0
  %1054 = vmatprep.subr.mxu0 0.0
  %1055 = vmatpush1.msra.mxu0 0.0
  %1056 = vmatprep.subr.mxu0 0.0
  %1057 = vmatpush1.msra.mxu0 0.0
  %1058 = vmatprep.subr.mxu0 0.0
  %1059 = vmatpush1.msra.mxu0 0.0
  %1060 = vmatprep.subr.mxu0 0.0
  %1061 = vmatpush1.msra.mxu0 0.0
  %1062 = vmatprep.subr.mxu0 0.0
  %1063 = vmatpush1.msra.mxu0 0.0
  %1064 = vmatprep.subr.mxu0 0.0
  %1065 = vmatpush1.msra.mxu0 0.0
  %1066 = vmatprep.subr.mxu0 0.0
  %1067 = vmatpush1.msra.mxu0 0.0
  %1068 = vmatprep.subr.mxu0 0.0
  %1069 = vmatpush1.msra.mxu0 0.0
  %1070 = vmatprep.subr.mxu0 0.0
  %1071 = vmatpush1.msra.mxu0 0.0
  %1072 = vmatprep.subr.mxu0 0.0
  %1073 = vmatpush1.msra.mxu0 0.0
  %1074 = vmatprep.subr.mxu0 0.0
  %1075 = vmatpush1.msra.mxu0 0.0
  %1076 = vmatprep.subr.mxu0 0.0
  %1077 = vmatpush1.msra.mxu0 0.0
  %1078 = vmatprep.subr.mxu0 0.0
  %1079 = vmatpush1.msra.mxu0 0.0
  %1080 = vmatprep.subr.mxu0 0.0
  %1081 = vmatpush1.msra.mxu0 0.0
  %1082 = vmatprep.subr.mxu0 0.0
  %1083 = vmatpush1.msra.mxu0 0.0
  %1084 = vmatprep.subr.mxu0 0.0
  %1085 = vmatpush1.msra.mxu0 0.0
  %1086 = vmatprep.subr.mxu0 0.0
  %1087 = vmatpush1.msra.mxu0 0.0
  %1088 = vmatprep.mubr.f32.mxu0 0.0
  %1089 = vmatmul.mubr.f32.gmra.mrb[0].mxu0 %v1022
  %v1090 = vpop.f32.mrb[0].mxu0
  %v1091 = vadd.f32 %v397, %v1090
  %v1092 = vpop.f32.mrb[0].mxu0
  %1093 = vdwg.mxu0
  %v1094 = vxor.u32 %v1091, 2147483648
  %v1095 = vmul.f32 %v1094, 1.442695
  %v1096 = vpow.pop %v1095
  %v1097 = vadd.f32 %v1096, 1.0
  %v1098 = vrcp.pop %v1097
  %v1099 = vmul.f32 1.0, %v1098
  %v1100 = vmul.f32 %v1099, 2.0
  %v1101 = vsub.f32 %v1100, 1.0
  %v1102 = vmul.f32 %v1099, %v905
  %1104 = vrot.lane.b32.xlu0 %v1101, 64
  %v1105 = vpop.permute.xlu0 %1104
  %v1107 = vmul.f32 %v1099, %v1105
  %1109 = vrot.lane.b32.xlu0 %v1107, 32
  %v1110 = vpop.permute.xlu0 %1109
  %v1112 = vadd.f32 %v1102, %v1110
  %v1113 = vtanh.pop %v1112
  %1115 = vrot.lane.b32.xlu0 %v1113, 64
  %v1116 = vpop.permute.xlu0 %1115
  %v1118 = vmul.f32 %v1099, %v1116
  %1120 = vrot.lane.b32.xlu0 %v1012, 32
  %v1121 = vpop.permute.xlu0 %1120
  %v1122 = vsel %vm188, %v1121, 0
  %1124 = vmatprep.subr.mxu0 0.0
  %1125 = vmatpush1.msra.mxu0 %v175
  %1126 = vmatprep.subr.mxu0 0.0
  %1127 = vmatpush1.msra.mxu0 %v176
  %1128 = vmatprep.subr.mxu0 0.0
  %1129 = vmatpush1.msra.mxu0 %v177
  %1130 = vmatprep.subr.mxu0 0.0
  %1131 = vmatpush1.msra.mxu0 %v178
  %1132 = vmatprep.subr.mxu0 0.0
  %1133 = vmatpush1.msra.mxu0 0.0
  %1134 = vmatprep.subr.mxu0 0.0
  %1135 = vmatpush1.msra.mxu0 0.0
  %1136 = vmatprep.subr.mxu0 0.0
  %1137 = vmatpush1.msra.mxu0 0.0
  %1138 = vmatprep.subr.mxu0 0.0
  %1139 = vmatpush1.msra.mxu0 0.0
  %1140 = vmatprep.subr.mxu0 0.0
  %1141 = vmatpush1.msra.mxu0 0.0
  %1142 = vmatprep.subr.mxu0 0.0
  %1143 = vmatpush1.msra.mxu0 0.0
  %1144 = vmatprep.subr.mxu0 0.0
  %1145 = vmatpush1.msra.mxu0 0.0
  %1146 = vmatprep.subr.mxu0 0.0
  %1147 = vmatpush1.msra.mxu0 0.0
  %1148 = vmatprep.subr.mxu0 0.0
  %1149 = vmatpush1.msra.mxu0 0.0
  %1150 = vmatprep.subr.mxu0 0.0
  %1151 = vmatpush1.msra.mxu0 0.0
  %1152 = vmatprep.subr.mxu0 0.0
  %1153 = vmatpush1.msra.mxu0 0.0
  %1154 = vmatprep.subr.mxu0 0.0
  %1155 = vmatpush1.msra.mxu0 0.0
  %1156 = vmatprep.subr.mxu0 0.0
  %1157 = vmatpush1.msra.mxu0 0.0
  %1158 = vmatprep.subr.mxu0 0.0
  %1159 = vmatpush1.msra.mxu0 0.0
  %1160 = vmatprep.subr.mxu0 0.0
  %1161 = vmatpush1.msra.mxu0 0.0
  %1162 = vmatprep.subr.mxu0 0.0
  %1163 = vmatpush1.msra.mxu0 0.0
  %1164 = vmatprep.subr.mxu0 0.0
  %1165 = vmatpush1.msra.mxu0 0.0
  %1166 = vmatprep.subr.mxu0 0.0
  %1167 = vmatpush1.msra.mxu0 0.0
  %1168 = vmatprep.subr.mxu0 0.0
  %1169 = vmatpush1.msra.mxu0 0.0
  %1170 = vmatprep.subr.mxu0 0.0
  %1171 = vmatpush1.msra.mxu0 0.0
  %1172 = vmatprep.subr.mxu0 0.0
  %1173 = vmatpush1.msra.mxu0 0.0
  %1174 = vmatprep.subr.mxu0 0.0
  %1175 = vmatpush1.msra.mxu0 0.0
  %1176 = vmatprep.subr.mxu0 0.0
  %1177 = vmatpush1.msra.mxu0 0.0
  %1178 = vmatprep.subr.mxu0 0.0
  %1179 = vmatpush1.msra.mxu0 0.0
  %1180 = vmatprep.subr.mxu0 0.0
  %1181 = vmatpush1.msra.mxu0 0.0
  %1182 = vmatprep.subr.mxu0 0.0
  %1183 = vmatpush1.msra.mxu0 0.0
  %1184 = vmatprep.subr.mxu0 0.0
  %1185 = vmatpush1.msra.mxu0 0.0
  %1186 = vmatprep.subr.mxu0 0.0
  %1187 = vmatpush1.msra.mxu0 0.0
  %1188 = vmatprep.mubr.f32.mxu0 0.0
  %1189 = vmatmul.mubr.f32.gmra.mrb[0].mxu0 %v1122
  %v1190 = vpop.f32.mrb[0].mxu0
  %v1191 = vadd.f32 0.0, %v1190
  %v1192 = vpop.f32.mrb[0].mxu0
  %1193 = vdwg.mxu0
  %v1194 = vadd.f32 %v162, %v1191
  %v1195 = vxor.u32 %v1194, 2147483648
  %v1196 = vmul.f32 %v1195, 1.442695
  %v1197 = vpow.pop %v1196
  %v1198 = vadd.f32 %v1197, 1.0
  %v1199 = vrcp.pop %v1198
  %v1200 = vmul.f32 1.0, %v1199
  %v1201 = vmul.f32 %v1200, 2.0
  %v1202 = vsub.f32 %v1201, 1.0
  %v1203 = vmul.f32 %v1200, %v1006
  %1205 = vrot.lane.b32.xlu0 %v1202, 64
  %v1206 = vpop.permute.xlu0 %1205
  %v1208 = vmul.f32 %v1200, %v1206
  %1210 = vrot.lane.b32.xlu0 %v1208, 32
  %v1211 = vpop.permute.xlu0 %1210
  %v1213 = vadd.f32 %v1203, %v1211
  %v1214 = vtanh.pop %v1213
  %1216 = vrot.lane.b32.xlu0 %v1214, 64
  %v1217 = vpop.permute.xlu0 %1216
  %v1219 = vmul.f32 %v1200, %v1217
  %1221 = vrot.lane.b32.xlu0 %v1118, 32
  %v1222 = vpop.permute.xlu0 %1221
  %1224 = vrot.lane.b32.xlu0 %v1012, 64
  %v1225 = vpop.permute.xlu0 %1224
  %v1227 = vsel %vm188, %v1222, %v1225
  %v1229 = vsel %vm399, %v1227, 0
  %1231 = vmatprep.subr.mxu0 0.0
  %1232 = vmatpush1.msra.mxu0 %v179
  %1233 = vmatprep.subr.mxu0 0.0
  %1234 = vmatpush1.msra.mxu0 %v180
  %1235 = vmatprep.subr.mxu0 0.0
  %1236 = vmatpush1.msra.mxu0 %v181
  %1237 = vmatprep.subr.mxu0 0.0
  %1238 = vmatpush1.msra.mxu0 %v182
  %1239 = vmatprep.subr.mxu0 0.0
  %1240 = vmatpush1.msra.mxu0 %v183
  %1241 = vmatprep.subr.mxu0 0.0
  %1242 = vmatpush1.msra.mxu0 %v184
  %1243 = vmatprep.subr.mxu0 0.0
  %1244 = vmatpush1.msra.mxu0 %v185
  %1245 = vmatprep.subr.mxu0 0.0
  %1246 = vmatpush1.msra.mxu0 %v186
  %1247 = vmatprep.subr.mxu0 0.0
  %1248 = vmatpush1.msra.mxu0 0.0
  %1249 = vmatprep.subr.mxu0 0.0
  %1250 = vmatpush1.msra.mxu0 0.0
  %1251 = vmatprep.subr.mxu0 0.0
  %1252 = vmatpush1.msra.mxu0 0.0
  %1253 = vmatprep.subr.mxu0 0.0
  %1254 = vmatpush1.msra.mxu0 0.0
  %1255 = vmatprep.subr.mxu0 0.0
  %1256 = vmatpush1.msra.mxu0 0.0
  %1257 = vmatprep.subr.mxu0 0.0
  %1258 = vmatpush1.msra.mxu0 0.0
  %1259 = vmatprep.subr.mxu0 0.0
  %1260 = vmatpush1.msra.mxu0 0.0
  %1261 = vmatprep.subr.mxu0 0.0
  %1262 = vmatpush1.msra.mxu0 0.0
  %1263 = vmatprep.subr.mxu0 0.0
  %1264 = vmatpush1.msra.mxu0 0.0
  %1265 = vmatprep.subr.mxu0 0.0
  %1266 = vmatpush1.msra.mxu0 0.0
  %1267 = vmatprep.subr.mxu0 0.0
  %1268 = vmatpush1.msra.mxu0 0.0
  %1269 = vmatprep.subr.mxu0 0.0
  %1270 = vmatpush1.msra.mxu0 0.0
  %1271 = vmatprep.subr.mxu0 0.0
  %1272 = vmatpush1.msra.mxu0 0.0
  %1273 = vmatprep.subr.mxu0 0.0
  %1274 = vmatpush1.msra.mxu0 0.0
  %1275 = vmatprep.subr.mxu0 0.0
  %1276 = vmatpush1.msra.mxu0 0.0
  %1277 = vmatprep.subr.mxu0 0.0
  %1278 = vmatpush1.msra.mxu0 0.0
  %1279 = vmatprep.subr.mxu0 0.0
  %1280 = vmatpush1.msra.mxu0 0.0
  %1281 = vmatprep.subr.mxu0 0.0
  %1282 = vmatpush1.msra.mxu0 0.0
  %1283 = vmatprep.subr.mxu0 0.0
  %1284 = vmatpush1.msra.mxu0 0.0
  %1285 = vmatprep.subr.mxu0 0.0
  %1286 = vmatpush1.msra.mxu0 0.0
  %1287 = vmatprep.subr.mxu0 0.0
  %1288 = vmatpush1.msra.mxu0 0.0
  %1289 = vmatprep.subr.mxu0 0.0
  %1290 = vmatpush1.msra.mxu0 0.0
  %1291 = vmatprep.subr.mxu0 0.0
  %1292 = vmatpush1.msra.mxu0 0.0
  %1293 = vmatprep.subr.mxu0 0.0
  %1294 = vmatpush1.msra.mxu0 0.0
  %1295 = vmatprep.mubr.f32.mxu0 0.0
  %1296 = vmatmul.mubr.f32.gmra.mrb[0].mxu0 %v1229
  %v1297 = vpop.f32.mrb[0].mxu0
  %v1298 = vadd.f32 %v397, %v1297
  %v1299 = vpop.f32.mrb[0].mxu0
  %1300 = vdwg.mxu0
  %v1301 = vxor.u32 %v1298, 2147483648
  %v1302 = vmul.f32 %v1301, 1.442695
  %v1303 = vpow.pop %v1302
  %v1304 = vadd.f32 %v1303, 1.0
  %v1305 = vrcp.pop %v1304
  %v1306 = vmul.f32 1.0, %v1305
  %v1307 = vmul.f32 %v1306, 2.0
  %v1308 = vsub.f32 %v1307, 1.0
  %v1309 = vmul.f32 %v1306, %v1112
  %1311 = vrot.lane.b32.xlu0 %v1308, 64
  %v1312 = vpop.permute.xlu0 %1311
  %v1314 = vmul.f32 %v1306, %v1312
  %1316 = vrot.lane.b32.xlu0 %v1314, 32
  %v1317 = vpop.permute.xlu0 %1316
  %v1319 = vadd.f32 %v1309, %v1317
  %v1320 = vtanh.pop %v1319
  %1322 = vrot.lane.b32.xlu0 %v1320, 64
  %v1323 = vpop.permute.xlu0 %1322
  %v1325 = vmul.f32 %v1306, %v1323
  %1327 = vrot.lane.b32.xlu0 %v1219, 32
  %v1328 = vpop.permute.xlu0 %1327
  %v1329 = vsel %vm188, %v1328, 0
  %1331 = vmatprep.subr.mxu0 0.0
  %1332 = vmatpush1.msra.mxu0 %v175
  %1333 = vmatprep.subr.mxu0 0.0
  %1334 = vmatpush1.msra.mxu0 %v176
  %1335 = vmatprep.subr.mxu0 0.0
  %1336 = vmatpush1.msra.mxu0 %v177
  %1337 = vmatprep.subr.mxu0 0.0
  %1338 = vmatpush1.msra.mxu0 %v178
  %1339 = vmatprep.subr.mxu0 0.0
  %1340 = vmatpush1.msra.mxu0 0.0
  %1341 = vmatprep.subr.mxu0 0.0
  %1342 = vmatpush1.msra.mxu0 0.0
  %1343 = vmatprep.subr.mxu0 0.0
  %1344 = vmatpush1.msra.mxu0 0.0
  %1345 = vmatprep.subr.mxu0 0.0
  %1346 = vmatpush1.msra.mxu0 0.0
  %1347 = vmatprep.subr.mxu0 0.0
  %1348 = vmatpush1.msra.mxu0 0.0
  %1349 = vmatprep.subr.mxu0 0.0
  %1350 = vmatpush1.msra.mxu0 0.0
  %1351 = vmatprep.subr.mxu0 0.0
  %1352 = vmatpush1.msra.mxu0 0.0
  %1353 = vmatprep.subr.mxu0 0.0
  %1354 = vmatpush1.msra.mxu0 0.0
  %1355 = vmatprep.subr.mxu0 0.0
  %1356 = vmatpush1.msra.mxu0 0.0
  %1357 = vmatprep.subr.mxu0 0.0
  %1358 = vmatpush1.msra.mxu0 0.0
  %1359 = vmatprep.subr.mxu0 0.0
  %1360 = vmatpush1.msra.mxu0 0.0
  %1361 = vmatprep.subr.mxu0 0.0
  %1362 = vmatpush1.msra.mxu0 0.0
  %1363 = vmatprep.subr.mxu0 0.0
  %1364 = vmatpush1.msra.mxu0 0.0
  %1365 = vmatprep.subr.mxu0 0.0
  %1366 = vmatpush1.msra.mxu0 0.0
  %1367 = vmatprep.subr.mxu0 0.0
  %1368 = vmatpush1.msra.mxu0 0.0
  %1369 = vmatprep.subr.mxu0 0.0
  %1370 = vmatpush1.msra.mxu0 0.0
  %1371 = vmatprep.subr.mxu0 0.0
  %1372 = vmatpush1.msra.mxu0 0.0
  %1373 = vmatprep.subr.mxu0 0.0
  %1374 = vmatpush1.msra.mxu0 0.0
  %1375 = vmatprep.subr.mxu0 0.0
  %1376 = vmatpush1.msra.mxu0 0.0
  %1377 = vmatprep.subr.mxu0 0.0
  %1378 = vmatpush1.msra.mxu0 0.0
  %1379 = vmatprep.subr.mxu0 0.0
  %1380 = vmatpush1.msra.mxu0 0.0
  %1381 = vmatprep.subr.mxu0 0.0
  %1382 = vmatpush1.msra.mxu0 0.0
  %1383 = vmatprep.subr.mxu0 0.0
  %1384 = vmatpush1.msra.mxu0 0.0
  %1385 = vmatprep.subr.mxu0 0.0
  %1386 = vmatpush1.msra.mxu0 0.0
  %1387 = vmatprep.subr.mxu0 0.0
  %1388 = vmatpush1.msra.mxu0 0.0
  %1389 = vmatprep.subr.mxu0 0.0
  %1390 = vmatpush1.msra.mxu0 0.0
  %1391 = vmatprep.subr.mxu0 0.0
  %1392 = vmatpush1.msra.mxu0 0.0
  %1393 = vmatprep.subr.mxu0 0.0
  %1394 = vmatpush1.msra.mxu0 0.0
  %1395 = vmatprep.mubr.f32.mxu0 0.0
  %1396 = vmatmul.mubr.f32.gmra.mrb[0].mxu0 %v1329
  %v1397 = vpop.f32.mrb[0].mxu0
  %v1398 = vadd.f32 0.0, %v1397
  %v1399 = vpop.f32.mrb[0].mxu0
  %1400 = vdwg.mxu0
  %v1401 = vadd.f32 %v167, %v1398
  %v1402 = vxor.u32 %v1401, 2147483648
  %v1403 = vmul.f32 %v1402, 1.442695
  %v1404 = vpow.pop %v1403
  %v1405 = vadd.f32 %v1404, 1.0
  %v1406 = vrcp.pop %v1405
  %v1407 = vmul.f32 1.0, %v1406
  %v1408 = vmul.f32 %v1407, 2.0
  %v1409 = vsub.f32 %v1408, 1.0
  %v1410 = vmul.f32 %v1407, %v1213
  %1412 = vrot.lane.b32.xlu0 %v1409, 64
  %v1413 = vpop.permute.xlu0 %1412
  %v1415 = vmul.f32 %v1407, %v1413
  %1417 = vrot.lane.b32.xlu0 %v1415, 32
  %v1418 = vpop.permute.xlu0 %1417
  %v1420 = vadd.f32 %v1410, %v1418
  %v1421 = vtanh.pop %v1420
  %1423 = vrot.lane.b32.xlu0 %v1421, 64
  %v1424 = vpop.permute.xlu0 %1423
  %v1426 = vmul.f32 %v1407, %v1424
  %1428 = vrot.lane.b32.xlu0 %v1325, 32
  %v1429 = vpop.permute.xlu0 %1428
  %1431 = vrot.lane.b32.xlu0 %v1219, 64
  %v1432 = vpop.permute.xlu0 %1431
  %v1434 = vsel %vm188, %v1429, %v1432
  %v1436 = vsel %vm399, %v1434, 0
  %1438 = vmatprep.subr.mxu0 0.0
  %1439 = vmatpush1.msra.mxu0 %v179
  %1440 = vmatprep.subr.mxu0 0.0
  %1441 = vmatpush1.msra.mxu0 %v180
  %1442 = vmatprep.subr.mxu0 0.0
  %1443 = vmatpush1.msra.mxu0 %v181
  %1444 = vmatprep.subr.mxu0 0.0
  %1445 = vmatpush1.msra.mxu0 %v182
  %1446 = vmatprep.subr.mxu0 0.0
  %1447 = vmatpush1.msra.mxu0 %v183
  %1448 = vmatprep.subr.mxu0 0.0
  %1449 = vmatpush1.msra.mxu0 %v184
  %1450 = vmatprep.subr.mxu0 0.0
  %1451 = vmatpush1.msra.mxu0 %v185
  %1452 = vmatprep.subr.mxu0 0.0
  %1453 = vmatpush1.msra.mxu0 %v186
  %1454 = vmatprep.subr.mxu0 0.0
  %1455 = vmatpush1.msra.mxu0 0.0
  %1456 = vmatprep.subr.mxu0 0.0
  %1457 = vmatpush1.msra.mxu0 0.0
  %1458 = vmatprep.subr.mxu0 0.0
  %1459 = vmatpush1.msra.mxu0 0.0
  %1460 = vmatprep.subr.mxu0 0.0
  %1461 = vmatpush1.msra.mxu0 0.0
  %1462 = vmatprep.subr.mxu0 0.0
  %1463 = vmatpush1.msra.mxu0 0.0
  %1464 = vmatprep.subr.mxu0 0.0
  %1465 = vmatpush1.msra.mxu0 0.0
  %1466 = vmatprep.subr.mxu0 0.0
  %1467 = vmatpush1.msra.mxu0 0.0
  %1468 = vmatprep.subr.mxu0 0.0
  %1469 = vmatpush1.msra.mxu0 0.0
  %1470 = vmatprep.subr.mxu0 0.0
  %1471 = vmatpush1.msra.mxu0 0.0
  %1472 = vmatprep.subr.mxu0 0.0
  %1473 = vmatpush1.msra.mxu0 0.0
  %1474 = vmatprep.subr.mxu0 0.0
  %1475 = vmatpush1.msra.mxu0 0.0
  %1476 = vmatprep.subr.mxu0 0.0
  %1477 = vmatpush1.msra.mxu0 0.0
  %1478 = vmatprep.subr.mxu0 0.0
  %1479 = vmatpush1.msra.mxu0 0.0
  %1480 = vmatprep.subr.mxu0 0.0
  %1481 = vmatpush1.msra.mxu0 0.0
  %1482 = vmatprep.subr.mxu0 0.0
  %1483 = vmatpush1.msra.mxu0 0.0
  %1484 = vmatprep.subr.mxu0 0.0
  %1485 = vmatpush1.msra.mxu0 0.0
  %1486 = vmatprep.subr.mxu0 0.0
  %1487 = vmatpush1.msra.mxu0 0.0
  %1488 = vmatprep.subr.mxu0 0.0
  %1489 = vmatpush1.msra.mxu0 0.0
  %1490 = vmatprep.subr.mxu0 0.0
  %1491 = vmatpush1.msra.mxu0 0.0
  %1492 = vmatprep.subr.mxu0 0.0
  %1493 = vmatpush1.msra.mxu0 0.0
  %1494 = vmatprep.subr.mxu0 0.0
  %1495 = vmatpush1.msra.mxu0 0.0
  %1496 = vmatprep.subr.mxu0 0.0
  %1497 = vmatpush1.msra.mxu0 0.0
  %1498 = vmatprep.subr.mxu0 0.0
  %1499 = vmatpush1.msra.mxu0 0.0
  %1500 = vmatprep.subr.mxu0 0.0
  %1501 = vmatpush1.msra.mxu0 0.0
  %1502 = vmatprep.mubr.f32.mxu0 0.0
  %1503 = vmatmul.mubr.f32.gmra.mrb[0].mxu0 %v1436
  %v1504 = vpop.f32.mrb[0].mxu0
  %v1505 = vadd.f32 %v397, %v1504
  %v1506 = vpop.f32.mrb[0].mxu0
  %1507 = vdwg.mxu0
  %v1508 = vxor.u32 %v1505, 2147483648
  %v1509 = vmul.f32 %v1508, 1.442695
  %v1510 = vpow.pop %v1509
  %v1511 = vadd.f32 %v1510, 1.0
  %v1512 = vrcp.pop %v1511
  %v1513 = vmul.f32 1.0, %v1512
  %v1514 = vmul.f32 %v1513, 2.0
  %v1515 = vsub.f32 %v1514, 1.0
  %v1516 = vmul.f32 %v1513, %v1319
  %1518 = vrot.lane.b32.xlu0 %v1515, 64
  %v1519 = vpop.permute.xlu0 %1518
  %v1521 = vmul.f32 %v1513, %v1519
  %1523 = vrot.lane.b32.xlu0 %v1521, 32
  %v1524 = vpop.permute.xlu0 %1523
  %v1526 = vadd.f32 %v1516, %v1524
  %v1527 = vtanh.pop %v1526
  %1529 = vrot.lane.b32.xlu0 %v1527, 64
  %v1530 = vpop.permute.xlu0 %1529
  %v1532 = vmul.f32 %v1513, %v1530
  %1534 = vrot.lane.b32.xlu0 %v1426, 32
  %v1535 = vpop.permute.xlu0 %1534
  %v1536 = vsel %vm188, %v1535, 0
  %1538 = vmatprep.subr.mxu0 0.0
  %1539 = vmatpush1.msra.mxu0 %v175
  %1540 = vmatprep.subr.mxu0 0.0
  %1541 = vmatpush1.msra.mxu0 %v176
  %1542 = vmatprep.subr.mxu0 0.0
  %1543 = vmatpush1.msra.mxu0 %v177
  %1544 = vmatprep.subr.mxu0 0.0
  %1545 = vmatpush1.msra.mxu0 %v178
  %1546 = vmatprep.subr.mxu0 0.0
  %1547 = vmatpush1.msra.mxu0 0.0
  %1548 = vmatprep.subr.mxu0 0.0
  %1549 = vmatpush1.msra.mxu0 0.0
  %1550 = vmatprep.subr.mxu0 0.0
  %1551 = vmatpush1.msra.mxu0 0.0
  %1552 = vmatprep.subr.mxu0 0.0
  %1553 = vmatpush1.msra.mxu0 0.0
  %1554 = vmatprep.subr.mxu0 0.0
  %1555 = vmatpush1.msra.mxu0 0.0
  %1556 = vmatprep.subr.mxu0 0.0
  %1557 = vmatpush1.msra.mxu0 0.0
  %1558 = vmatprep.subr.mxu0 0.0
  %1559 = vmatpush1.msra.mxu0 0.0
  %1560 = vmatprep.subr.mxu0 0.0
  %1561 = vmatpush1.msra.mxu0 0.0
  %1562 = vmatprep.subr.mxu0 0.0
  %1563 = vmatpush1.msra.mxu0 0.0
  %1564 = vmatprep.subr.mxu0 0.0
  %1565 = vmatpush1.msra.mxu0 0.0
  %1566 = vmatprep.subr.mxu0 0.0
  %1567 = vmatpush1.msra.mxu0 0.0
  %1568 = vmatprep.subr.mxu0 0.0
  %1569 = vmatpush1.msra.mxu0 0.0
  %1570 = vmatprep.subr.mxu0 0.0
  %1571 = vmatpush1.msra.mxu0 0.0
  %1572 = vmatprep.subr.mxu0 0.0
  %1573 = vmatpush1.msra.mxu0 0.0
  %1574 = vmatprep.subr.mxu0 0.0
  %1575 = vmatpush1.msra.mxu0 0.0
  %1576 = vmatprep.subr.mxu0 0.0
  %1577 = vmatpush1.msra.mxu0 0.0
  %1578 = vmatprep.subr.mxu0 0.0
  %1579 = vmatpush1.msra.mxu0 0.0
  %1580 = vmatprep.subr.mxu0 0.0
  %1581 = vmatpush1.msra.mxu0 0.0
  %1582 = vmatprep.subr.mxu0 0.0
  %1583 = vmatpush1.msra.mxu0 0.0
  %1584 = vmatprep.subr.mxu0 0.0
  %1585 = vmatpush1.msra.mxu0 0.0
  %1586 = vmatprep.subr.mxu0 0.0
  %1587 = vmatpush1.msra.mxu0 0.0
  %1588 = vmatprep.subr.mxu0 0.0
  %1589 = vmatpush1.msra.mxu0 0.0
  %1590 = vmatprep.subr.mxu0 0.0
  %1591 = vmatpush1.msra.mxu0 0.0
  %1592 = vmatprep.subr.mxu0 0.0
  %1593 = vmatpush1.msra.mxu0 0.0
  %1594 = vmatprep.subr.mxu0 0.0
  %1595 = vmatpush1.msra.mxu0 0.0
  %1596 = vmatprep.subr.mxu0 0.0
  %1597 = vmatpush1.msra.mxu0 0.0
  %1598 = vmatprep.subr.mxu0 0.0
  %1599 = vmatpush1.msra.mxu0 0.0
  %1600 = vmatprep.subr.mxu0 0.0
  %1601 = vmatpush1.msra.mxu0 0.0
  %1602 = vmatprep.mubr.f32.mxu0 0.0
  %1603 = vmatmul.mubr.f32.gmra.mrb[0].mxu0 %v1536
  %v1604 = vpop.f32.mrb[0].mxu0
  %v1605 = vadd.f32 0.0, %v1604
  %v1606 = vpop.f32.mrb[0].mxu0
  %1607 = vdwg.mxu0
  %v1608 = vadd.f32 %v172, %v1605
  %v1609 = vxor.u32 %v1608, 2147483648
  %v1610 = vmul.f32 %v1609, 1.442695
  %v1611 = vpow.pop %v1610
  %v1612 = vadd.f32 %v1611, 1.0
  %v1613 = vrcp.pop %v1612
  %v1614 = vmul.f32 1.0, %v1613
  %v1615 = vmul.f32 %v1614, 2.0
  %v1616 = vsub.f32 %v1615, 1.0
  %v1617 = vmul.f32 %v1614, %v1420
  %1619 = vrot.lane.b32.xlu0 %v1616, 64
  %v1620 = vpop.permute.xlu0 %1619
  %v1622 = vmul.f32 %v1614, %v1620
  %1624 = vrot.lane.b32.xlu0 %v1622, 32
  %v1625 = vpop.permute.xlu0 %1624
  %v1627 = vadd.f32 %v1617, %v1625
  %v1628 = vtanh.pop %v1627
  %1630 = vrot.lane.b32.xlu0 %v1628, 64
  %v1631 = vpop.permute.xlu0 %1630
  %v1633 = vmul.f32 %v1614, %v1631
  %1635 = vrot.lane.b32.xlu0 %v1532, 32
  %v1636 = vpop.permute.xlu0 %1635
  %1638 = vrot.lane.b32.xlu0 %v1426, 64
  %v1639 = vpop.permute.xlu0 %1638
  %v1641 = vsel %vm188, %v1636, %v1639
  %v1643 = vsel %vm399, %v1641, 0
  %1645 = vmatprep.subr.mxu0 0.0
  %1646 = vmatpush1.msra.mxu0 %v179
  %1647 = vmatprep.subr.mxu0 0.0
  %1648 = vmatpush1.msra.mxu0 %v180
  %1649 = vmatprep.subr.mxu0 0.0
  %1650 = vmatpush1.msra.mxu0 %v181
  %1651 = vmatprep.subr.mxu0 0.0
  %1652 = vmatpush1.msra.mxu0 %v182
  %1653 = vmatprep.subr.mxu0 0.0
  %1654 = vmatpush1.msra.mxu0 %v183
  %1655 = vmatprep.subr.mxu0 0.0
  %1656 = vmatpush1.msra.mxu0 %v184
  %1657 = vmatprep.subr.mxu0 0.0
  %1658 = vmatpush1.msra.mxu0 %v185
  %1659 = vmatprep.subr.mxu0 0.0
  %1660 = vmatpush1.msra.mxu0 %v186
  %1661 = vmatprep.subr.mxu0 0.0
  %1662 = vmatpush1.msra.mxu0 0.0
  %1663 = vmatprep.subr.mxu0 0.0
  %1664 = vmatpush1.msra.mxu0 0.0
  %1665 = vmatprep.subr.mxu0 0.0
  %1666 = vmatpush1.msra.mxu0 0.0
  %1667 = vmatprep.subr.mxu0 0.0
  %1668 = vmatpush1.msra.mxu0 0.0
  %1669 = vmatprep.subr.mxu0 0.0
  %1670 = vmatpush1.msra.mxu0 0.0
  %1671 = vmatprep.subr.mxu0 0.0
  %1672 = vmatpush1.msra.mxu0 0.0
  %1673 = vmatprep.subr.mxu0 0.0
  %1674 = vmatpush1.msra.mxu0 0.0
  %1675 = vmatprep.subr.mxu0 0.0
  %1676 = vmatpush1.msra.mxu0 0.0
  %1677 = vmatprep.subr.mxu0 0.0
  %1678 = vmatpush1.msra.mxu0 0.0
  %1679 = vmatprep.subr.mxu0 0.0
  %1680 = vmatpush1.msra.mxu0 0.0
  %1681 = vmatprep.subr.mxu0 0.0
  %1682 = vmatpush1.msra.mxu0 0.0
  %1683 = vmatprep.subr.mxu0 0.0
  %1684 = vmatpush1.msra.mxu0 0.0
  %1685 = vmatprep.subr.mxu0 0.0
  %1686 = vmatpush1.msra.mxu0 0.0
  %1687 = vmatprep.subr.mxu0 0.0
  %1688 = vmatpush1.msra.mxu0 0.0
  %1689 = vmatprep.subr.mxu0 0.0
  %1690 = vmatpush1.msra.mxu0 0.0
  %1691 = vmatprep.subr.mxu0 0.0
  %1692 = vmatpush1.msra.mxu0 0.0
  %1693 = vmatprep.subr.mxu0 0.0
  %1694 = vmatpush1.msra.mxu0 0.0
  %1695 = vmatprep.subr.mxu0 0.0
  %1696 = vmatpush1.msra.mxu0 0.0
  %1697 = vmatprep.subr.mxu0 0.0
  %1698 = vmatpush1.msra.mxu0 0.0
  %1699 = vmatprep.subr.mxu0 0.0
  %1700 = vmatpush1.msra.mxu0 0.0
  %1701 = vmatprep.subr.mxu0 0.0
  %1702 = vmatpush1.msra.mxu0 0.0
  %1703 = vmatprep.subr.mxu0 0.0
  %1704 = vmatpush1.msra.mxu0 0.0
  %1705 = vmatprep.subr.mxu0 0.0
  %1706 = vmatpush1.msra.mxu0 0.0
  %1707 = vmatprep.subr.mxu0 0.0
  %1708 = vmatpush1.msra.mxu0 0.0
  %1709 = vmatprep.mubr.f32.mxu0 0.0
  %1710 = vmatmul.mubr.f32.gmra.mrb[0].mxu0 %v1643
  %v1711 = vpop.f32.mrb[0].mxu0
  %v1712 = vadd.f32 %v397, %v1711
  %v1713 = vpop.f32.mrb[0].mxu0
  %1714 = vdwg.mxu0
  %v1715 = vxor.u32 %v1712, 2147483648
  %v1716 = vmul.f32 %v1715, 1.442695
  %v1717 = vpow.pop %v1716
  %v1718 = vadd.f32 %v1717, 1.0
  %v1719 = vrcp.pop %v1718
  %v1720 = vmul.f32 1.0, %v1719
  %v1721 = vmul.f32 %v1720, 2.0
  %v1722 = vsub.f32 %v1721, 1.0
  %v1723 = vmul.f32 %v1720, %v1526
  %1725 = vrot.lane.b32.xlu0 %v1722, 64
  %v1726 = vpop.permute.xlu0 %1725
  %v1728 = vmul.f32 %v1720, %v1726
  %1730 = vrot.lane.b32.xlu0 %v1728, 32
  %v1731 = vpop.permute.xlu0 %1730
  %v1733 = vadd.f32 %v1723, %v1731
  %v1734 = vtanh.pop %v1733
  %1736 = vrot.lane.b32.xlu0 %v1734, 64
  %v1737 = vpop.permute.xlu0 %1736
  %v1739 = vmul.f32 %v1720, %v1737
  %1741 = vrot.lane.b32.xlu0 %v1739, 32
  %v1742 = vpop.permute.xlu0 %1741
  %1745 = vrot.lane.b32.xlu0 %v1633, 64
  %v1746 = vpop.permute.xlu0 %1745
  %v1748 = vsel %vm188, %v1742, %v1746
  %v1750 = vsel %vm399, %v1748, 0
  %1752 = vmatprep.subr.mxu0 0.0
  %1753 = vmatpush1.msra.mxu0 %v179
  %1754 = vmatprep.subr.mxu0 0.0
  %1755 = vmatpush1.msra.mxu0 %v180
  %1756 = vmatprep.subr.mxu0 0.0
  %1757 = vmatpush1.msra.mxu0 %v181
  %1758 = vmatprep.subr.mxu0 0.0
  %1759 = vmatpush1.msra.mxu0 %v182
  %1760 = vmatprep.subr.mxu0 0.0
  %1761 = vmatpush1.msra.mxu0 %v183
  %1762 = vmatprep.subr.mxu0 0.0
  %1763 = vmatpush1.msra.mxu0 %v184
  %1764 = vmatprep.subr.mxu0 0.0
  %1765 = vmatpush1.msra.mxu0 %v185
  %1766 = vmatprep.subr.mxu0 0.0
  %1767 = vmatpush1.msra.mxu0 %v186
  %1768 = vmatprep.subr.mxu0 0.0
  %1769 = vmatpush1.msra.mxu0 0.0
  %1770 = vmatprep.subr.mxu0 0.0
  %1771 = vmatpush1.msra.mxu0 0.0
  %1772 = vmatprep.subr.mxu0 0.0
  %1773 = vmatpush1.msra.mxu0 0.0
  %1774 = vmatprep.subr.mxu0 0.0
  %1775 = vmatpush1.msra.mxu0 0.0
  %1776 = vmatprep.subr.mxu0 0.0
  %1777 = vmatpush1.msra.mxu0 0.0
  %1778 = vmatprep.subr.mxu0 0.0
  %1779 = vmatpush1.msra.mxu0 0.0
  %1780 = vmatprep.subr.mxu0 0.0
  %1781 = vmatpush1.msra.mxu0 0.0
  %1782 = vmatprep.subr.mxu0 0.0
  %1783 = vmatpush1.msra.mxu0 0.0
  %1784 = vmatprep.subr.mxu0 0.0
  %1785 = vmatpush1.msra.mxu0 0.0
  %1786 = vmatprep.subr.mxu0 0.0
  %1787 = vmatpush1.msra.mxu0 0.0
  %1788 = vmatprep.subr.mxu0 0.0
  %1789 = vmatpush1.msra.mxu0 0.0
  %1790 = vmatprep.subr.mxu0 0.0
  %1791 = vmatpush1.msra.mxu0 0.0
  %1792 = vmatprep.subr.mxu0 0.0
  %1793 = vmatpush1.msra.mxu0 0.0
  %1794 = vmatprep.subr.mxu0 0.0
  %1795 = vmatpush1.msra.mxu0 0.0
  %1796 = vmatprep.subr.mxu0 0.0
  %1797 = vmatpush1.msra.mxu0 0.0
  %1798 = vmatprep.subr.mxu0 0.0
  %1799 = vmatpush1.msra.mxu0 0.0
  %1800 = vmatprep.subr.mxu0 0.0
  %1801 = vmatpush1.msra.mxu0 0.0
  %1802 = vmatprep.subr.mxu0 0.0
  %1803 = vmatpush1.msra.mxu0 0.0
  %1804 = vmatprep.subr.mxu0 0.0
  %1805 = vmatpush1.msra.mxu0 0.0
  %1806 = vmatprep.subr.mxu0 0.0
  %1807 = vmatpush1.msra.mxu0 0.0
  %1808 = vmatprep.subr.mxu0 0.0
  %1809 = vmatpush1.msra.mxu0 0.0
  %1810 = vmatprep.subr.mxu0 0.0
  %1811 = vmatpush1.msra.mxu0 0.0
  %1812 = vmatprep.subr.mxu0 0.0
  %1813 = vmatpush1.msra.mxu0 0.0
  %1814 = vmatprep.subr.mxu0 0.0
  %1815 = vmatpush1.msra.mxu0 0.0
  %1816 = vmatprep.mubr.f32.mxu0 0.0
  %1817 = vmatmul.mubr.f32.gmra.mrb[0].mxu0 %v1750
  %v1818 = vpop.f32.mrb[0].mxu0
  %v1819 = vadd.f32 %v397, %v1818
  %v1820 = vpop.f32.mrb[0].mxu0
  %1821 = vdwg.mxu0
  %v1822 = vxor.u32 %v1819, 2147483648
  %v1823 = vmul.f32 %v1822, 1.442695
  %v1824 = vpow.pop %v1823
  %v1825 = vadd.f32 %v1824, 1.0
  %v1826 = vrcp.pop %v1825
  %v1827 = vmul.f32 1.0, %v1826
  %v1828 = vmul.f32 %v1827, 2.0
  %v1829 = vsub.f32 %v1828, 1.0
  %v1830 = vmul.f32 %v1827, %v1733
  %1832 = vrot.lane.b32.xlu0 %v1829, 64
  %v1833 = vpop.permute.xlu0 %1832
  %v1835 = vmul.f32 %v1827, %v1833
  %1837 = vrot.lane.b32.xlu0 %v1835, 32
  %v1838 = vpop.permute.xlu0 %1837
  %v1840 = vadd.f32 %v1830, %v1838
  %v1841 = vtanh.pop %v1840
  %1843 = vrot.lane.b32.xlu0 %v1841, 64
  %v1844 = vpop.permute.xlu0 %1843
  %v1846 = vmul.f32 %v1827, %v1844
  %v1847 = vld [vmem:[%s6] sm:$0xff]
  %v1848 = vld [vmem:[%s6 + $0x8] sm:$0xff]
  %v1849 = vld [vmem:[%s6 + $0x10] sm:$0xff]
  %v1850 = vld [vmem:[%s6 + $0x18] sm:$0xff]
  %v1851 = vld [vmem:[%s7] sm:$0x1]
  %v1853 = vlaneseq
  %v1854 = vshrl.u32 %v1853, 7
  %v1855 = vsub.s32 0, %v1854
  %v1856 = vrot.slane %v1851, %v1855
  %1859 = vrot.lane.b32.xlu0 %v1846, 32
  %v1860 = vpop.permute.xlu0 %1859
  %v1861 = vsel %vm188, %v1860, 0
  %1863 = vmatprep.subr.mxu0 0.0
  %1864 = vmatpush1.msra.mxu0 %v1847
  %1865 = vmatprep.subr.mxu0 0.0
  %1866 = vmatpush1.msra.mxu0 %v1848
  %1867 = vmatprep.subr.mxu0 0.0
  %1868 = vmatpush1.msra.mxu0 %v1849
  %1869 = vmatprep.subr.mxu0 0.0
  %1870 = vmatpush1.msra.mxu0 %v1850
  %1871 = vmatprep.subr.mxu0 0.0
  %1872 = vmatpush1.msra.mxu0 0.0
  %1873 = vmatprep.subr.mxu0 0.0
  %1874 = vmatpush1.msra.mxu0 0.0
  %1875 = vmatprep.subr.mxu0 0.0
  %1876 = vmatpush1.msra.mxu0 0.0
  %1877 = vmatprep.subr.mxu0 0.0
  %1878 = vmatpush1.msra.mxu0 0.0
  %1879 = vmatprep.subr.mxu0 0.0
  %1880 = vmatpush1.msra.mxu0 0.0
  %1881 = vmatprep.subr.mxu0 0.0
  %1882 = vmatpush1.msra.mxu0 0.0
  %1883 = vmatprep.subr.mxu0 0.0
  %1884 = vmatpush1.msra.mxu0 0.0
  %1885 = vmatprep.subr.mxu0 0.0
  %1886 = vmatpush1.msra.mxu0 0.0
  %1887 = vmatprep.subr.mxu0 0.0
  %1888 = vmatpush1.msra.mxu0 0.0
  %1889 = vmatprep.subr.mxu0 0.0
  %1890 = vmatpush1.msra.mxu0 0.0
  %1891 = vmatprep.subr.mxu0 0.0
  %1892 = vmatpush1.msra.mxu0 0.0
  %1893 = vmatprep.subr.mxu0 0.0
  %1894 = vmatpush1.msra.mxu0 0.0
  %1895 = vmatprep.subr.mxu0 0.0
  %1896 = vmatpush1.msra.mxu0 0.0
  %1897 = vmatprep.subr.mxu0 0.0
  %1898 = vmatpush1.msra.mxu0 0.0
  %1899 = vmatprep.subr.mxu0 0.0
  %1900 = vmatpush1.msra.mxu0 0.0
  %1901 = vmatprep.subr.mxu0 0.0
  %1902 = vmatpush1.msra.mxu0 0.0
  %1903 = vmatprep.subr.mxu0 0.0
  %1904 = vmatpush1.msra.mxu0 0.0
  %1905 = vmatprep.subr.mxu0 0.0
  %1906 = vmatpush1.msra.mxu0 0.0
  %1907 = vmatprep.subr.mxu0 0.0
  %1908 = vmatpush1.msra.mxu0 0.0
  %1909 = vmatprep.subr.mxu0 0.0
  %1910 = vmatpush1.msra.mxu0 0.0
  %1911 = vmatprep.subr.mxu0 0.0
  %1912 = vmatpush1.msra.mxu0 0.0
  %1913 = vmatprep.subr.mxu0 0.0
  %1914 = vmatpush1.msra.mxu0 0.0
  %1915 = vmatprep.subr.mxu0 0.0
  %1916 = vmatpush1.msra.mxu0 0.0
  %1917 = vmatprep.subr.mxu0 0.0
  %1918 = vmatpush1.msra.mxu0 0.0
  %1919 = vmatprep.subr.mxu0 0.0
  %1920 = vmatpush1.msra.mxu0 0.0
  %1921 = vmatprep.subr.mxu0 0.0
  %1922 = vmatpush1.msra.mxu0 0.0
  %1923 = vmatprep.subr.mxu0 0.0
  %1924 = vmatpush1.msra.mxu0 0.0
  %1925 = vmatprep.subr.mxu0 0.0
  %1926 = vmatpush1.msra.mxu0 0.0
  %1927 = vmatprep.mubr.f32.mxu0 0.0
  %1928 = vmatmul.mubr.f32.gmra.mrb[0].mxu0 %v1861
  %v1929 = vpop.f32.mrb[0].mxu0
  %v1930 = vadd.f32 %v1856, %v1929
  %v1931 = vpop.f32.mrb[0].mxu0
  %1932 = vdwg.mxu0
  %1933 = vst [vmem:[%s8] sm:$0xff] %v1930
  // Predicated region
  $region34: #{vanilla_lstm_forward.1} parent=0 // pred_check
    _
  $region35: #{vanilla_lstm_forward.1} parent=0 // pred_check_branch
    %1935 = sbr.rel (0) target = $region37
  $region36: #{vanilla_lstm_forward.1} parent=0 // pred_region
    _
  $region37: #{vanilla_lstm_forward.1} parent=0 // pred_fallthru
    _
  // Predicated region
  $region38: #{vanilla_lstm_forward.1} parent=0 // pred_check
    _
  $region39: #{vanilla_lstm_forward.1} parent=0 // pred_check_branch
    %1937 = sbr.rel (0) target = $region41
  $region40: #{vanilla_lstm_forward.1} parent=0 // pred_region
    _
  $region41: #{vanilla_lstm_forward.1} parent=0 // pred_fallthru
    _

</llo_original>
